<compile_context>
chip_gen: v7x
topology: tpu7x:2x2x1
jax: 0.10.0
libtpu: 0.0.40
codegen_flags: <defaults>
</compile_context>

<pallas_src>
import math

import jax
import jax.numpy as jnp
from jax.experimental import pallas as pl
from jax.experimental.pallas import tpu as pltpu


_SQRT_2_OVER_PI = math.sqrt(2.0 / math.pi)


def _gelu_tanh(x):
    return 0.5 * x * (1.0 + jnp.tanh(_SQRT_2_OVER_PI * (x + 0.044715 * x * x * x)))


# ---------------------------------------------------------------------------
# Pallas kernel: fused (stride-phase packed) conv matmul + tanh-GELU
# ---------------------------------------------------------------------------
def _make_conv_gelu_kernel(l_out, q_taps):
    def kernel(z_ref, v_ref, o_ref):
        # z_ref: (Lq, Cs) bf16   v_ref: (Q, Cs, tn) bf16   o_ref: (L_out, tn)
        acc = jnp.dot(z_ref[pl.ds(0, l_out), :], v_ref[0],
                      preferred_element_type=jnp.float32)
        for q in range(1, q_taps):
            acc = acc + jnp.dot(z_ref[pl.ds(q, l_out), :], v_ref[q],
                                preferred_element_type=jnp.float32)
        o_ref[...] = _gelu_tanh(acc).astype(o_ref.dtype)
    return kernel


def _pick_tn(c_out, q_taps, c_super, l_q, l_out, out_itemsize,
             budget=24 * 1024 * 1024):
    """Largest Cout tile whose double-buffered working set fits `budget`."""
    candidates = [c_out] + [t for t in (512, 256, 128)
                            if t < c_out and c_out % t == 0]
    z_bytes = l_q * c_super * 2                       # bf16 activation block
    chosen = candidates[-1]
    for tn in candidates:
        w_bytes = q_taps * c_super * tn * 2
        o_bytes = l_out * tn * out_itemsize
        if 2 * (z_bytes + w_bytes + o_bytes) <= budget:
            chosen = tn
            break
    w_bytes = q_taps * c_super * chosen * 2
    o_bytes = l_out * chosen * out_itemsize
    est = 2 * (z_bytes + w_bytes + o_bytes)
    return chosen, est


def _conv1d_gelu(x_blc, v_w, kernel_size, stride, out_dtype):
    """Fused Conv1d(no bias, VALID, stride) + tanh-GELU, channels-last.

    x_blc: (B, L, Cin) activations (bf16).
    v_w:   (Q, stride*Cin, Cout) bf16 packed weights (zero taps baked in).
    """
    b, l_in, c_in = x_blc.shape
    q_taps, c_super, c_out = v_w.shape
    assert c_super == stride * c_in
    l_out = (l_in - kernel_size) // stride + 1
    l_q = l_out + q_taps - 1
    need = stride * l_q
    # <= stride-1 zero rows; they only ever hit zero-padded weight taps.
    if need > l_in:
        x_blc = jnp.pad(x_blc, ((0, 0), (0, need - l_in), (0, 0)))
    elif need < l_in:
        x_blc = x_blc[:, :need, :]
    z = x_blc.reshape(b, l_q, c_super)          # free: groups `stride` rows

    out_itemsize = jnp.dtype(out_dtype).itemsize
    tn, vmem_est = _pick_tn(c_out, q_taps, c_super, l_q, l_out, out_itemsize)
    n_j = c_out // tn

    flops = 2 * b * l_out * (q_taps * c_super) * c_out
    bytes_accessed = (b * l_q * c_super * 2            # activations (bf16)
                      + q_taps * c_super * c_out * 2   # packed weights (bf16)
                      + b * l_out * c_out * out_itemsize)
    cost = pl.CostEstimate(flops=flops,
                           transcendentals=b * l_out * c_out,
                           bytes_accessed=bytes_accessed)

    return pl.pallas_call(
        _make_conv_gelu_kernel(l_out, q_taps),
        out_shape=jax.ShapeDtypeStruct((b, l_out, c_out), out_dtype),
        grid=(b, n_j),
        in_specs=[
            pl.BlockSpec((None, l_q, c_super), lambda bi, j: (bi, 0, 0)),
            pl.BlockSpec((q_taps, c_super, tn), lambda bi, j: (0, 0, j)),
        ],
        out_specs=pl.BlockSpec((None, l_out, tn), lambda bi, j: (bi, 0, j)),
        compiler_params=pltpu.CompilerParams(
            dimension_semantics=("parallel", "parallel"),
            vmem_limit_bytes=max(32 * 1024 * 1024, int(vmem_est * 1.25)),
        ),
        cost_estimate=cost,
    )(z, v_w)


# ---------------------------------------------------------------------------
# Parameters (weight_norm reparameterization + stride-phase packing, in init)
# ---------------------------------------------------------------------------
def _layer_specs(h):  # (Cin, Cout, K, stride)
    return [
        (1, h // 8, 10, 5),
        (h // 8, h // 4, 3, 2),
        (h // 4, h // 2, 3, 2),
        (h // 2, h, 3, 2),
        (h, h, 3, 2),
        (h, h, 2, 2),
    ]


def init_params(key, hidden_channels):
    params = []
    for (c_in, c_out, k, s) in _layer_specs(hidden_channels):
        key, kv, kg = jax.random.split(key, 3)
        v = jax.random.normal(kv, (c_out, c_in, k), jnp.float32) * 0.1
        g = jax.random.uniform(kg, (c_out, 1, 1), jnp.float32,
                               minval=0.5, maxval=1.5)
        # weight_norm: w = g * v / ||v||  (norm over (Cin, K) per out channel)
        norm = jnp.sqrt(jnp.sum(v * v, axis=(1, 2), keepdims=True))
        w = g * v / norm                                   # (Cout, Cin, K) f32
        # Pack tap index k = s*q + r  ->  V[q, r*Cin + c, o] = w[o, c, k]
        q = -(-k // s)                                     # ceil(K / stride)
        w_pad = jnp.zeros((c_out, c_in, q * s), jnp.float32).at[:, :, :k].set(w)
        v_w = jnp.transpose(w_pad.reshape(c_out, c_in, q, s),
                            (2, 3, 1, 0)).reshape(q, s * c_in, c_out)
        params.append(dict(w=w, v_w=v_w.astype(jnp.bfloat16), k=k, s=s))
    return params


# ---------------------------------------------------------------------------
# FeatureExtractor.forward
# ---------------------------------------------------------------------------
def feature_extractor_forward(x_ncl, params):
    """x_ncl: (B, 1, T) float32, T % 160 == 0.  Returns (B, C, T // 160) f32."""
    x = jnp.transpose(x_ncl, (0, 2, 1))                 # channels-last (B,T,1)
    x = jnp.pad(x, ((0, 0), (40, 40), (0, 0)))
    x = x.astype(jnp.bfloat16)
    n = len(params)
    for i, p in enumerate(params):
        out_dtype = jnp.float32 if i == n - 1 else jnp.bfloat16
        x = _conv1d_gelu(x, p["v_w"], p["k"], p["s"], out_dtype)
    return jnp.transpose(x, (0, 2, 1))                   # back to NCL


# ---------------------------------------------------------------------------
# References for verification
# ---------------------------------------------------------------------------
def _reference_forward_bf16(x_ncl, params):
    """lax-conv reference with matching bf16-operand / f32-accum numerics."""
    x = jnp.pad(x_ncl, ((0, 0), (0, 0), (40, 40))).astype(jnp.bfloat16)
    n = len(params)
    for i, p in enumerate(params):
        y = jax.lax.conv_general_dilated(
            x, p["w"].astype(jnp.bfloat16), window_strides=(p["s"],),
            padding="VALID", dimension_numbers=("NCH", "OIH", "NCH"),
            preferred_element_type=jnp.float32)
        y = jax.nn.gelu(y, approximate=True)
        x = y if i == n - 1 else y.astype(jnp.bfloat16)
    return x


def _reference_forward_f32(x_ncl, params):
    x = jnp.pad(x_ncl, ((0, 0), (0, 0), (40, 40)))
    for p in params:
        y = jax.lax.conv_general_dilated(
            x, p["w"], window_strides=(p["s"],), padding="VALID",
            dimension_numbers=("NCH", "OIH", "NCH"))
        x = jax.nn.gelu(y, approximate=True)
    return x


if __name__ == "__main__":
    hidden_channels = 32
    batch = 2
    wav_length = 320  # multiple of 160 -> 2 output frames

    key = jax.random.PRNGKey(0)
    kx, kp = jax.random.split(key)
    x = jax.random.normal(kx, (batch, 1, wav_length), jnp.float32)
    params = init_params(kp, hidden_channels)

    fwd = jax.jit(lambda xx: feature_extractor_forward(xx, params))
    out = jax.block_until_ready(fwd(x))

    assert out.shape == (batch, hidden_channels, wav_length // 160), out.shape
    assert out.dtype == jnp.float32

    # Tight check vs a matched-precision (bf16 operand / f32 accum) reference.
    ref_matched = _reference_forward_bf16(x, params)
    assert jnp.allclose(out, ref_matched, atol=5e-3, rtol=5e-3), (
        float(jnp.max(jnp.abs(out - ref_matched))))

    # Loose sanity check vs the pure-f32 reference (bf16 numerics drift only).
    ref_f32 = _reference_forward_f32(x, params)
    assert jnp.allclose(out, ref_f32, atol=1e-1, rtol=1e-1), (
        float(jnp.max(jnp.abs(out - ref_f32))))

    print("KERNEL_OK")
</pallas_src>

<mosaic_0001>
module attributes {stable_mosaic.version = 11 : i64} {
  func.func @kernel(%arg0: i32, %arg1: i32, %arg2: memref<1x80x5xbf16, #tpu.memory_space<vmem>>, %arg3: memref<2x5x4xbf16, #tpu.memory_space<vmem>>, %arg4: memref<1x79x4xbf16, #tpu.memory_space<vmem>>) attributes {dimension_semantics = [#tpu.dimension_semantics<parallel>, #tpu.dimension_semantics<parallel>], iteration_bounds = array<i64: 2, 1>, scalar_prefetch = 0 : i64, scratch_operands = 0 : i64, tpu.core_type = #tpu.core_type<tc>, window_params = [{transform_indices = @transform_0, window_bounds = array<i64: 1, 80, 5>}, {transform_indices = @transform_1, window_bounds = array<i64: 2, 5, 4>}, {transform_indices = @transform_2, window_bounds = array<i64: 1, 79, 4>}]} {
    %c0 = arith.constant 0 : index
    %c0_0 = arith.constant 0 : index
    %c0_1 = arith.constant 0 : index
    %0 = vector.load %arg2[%c0, %c0_0, %c0_1] : memref<1x80x5xbf16, #tpu.memory_space<vmem>>, vector<1x79x5xbf16>
    %1 = vector.shape_cast %0 : vector<1x79x5xbf16> to vector<79x5xbf16>
    %c0_2 = arith.constant 0 : index
    %c0_3 = arith.constant 0 : index
    %c0_4 = arith.constant 0 : index
    %2 = vector.load %arg3[%c0_2, %c0_3, %c0_4] : memref<2x5x4xbf16, #tpu.memory_space<vmem>>, vector<1x5x4xbf16>
    %3 = vector.shape_cast %2 : vector<1x5x4xbf16> to vector<5x4xbf16>
    %cst = arith.constant dense<0.000000e+00> : vector<79x4xf32>
    %4 = tpu.matmul %1, %3, %cst {dimension_numbers = #tpu.dot_dimension_numbers<[1], [0], [0], [1], [0, 0, 1, 1], [], []>} : vector<79x5xbf16>, vector<5x4xbf16>, vector<79x4xf32> -> vector<79x4xf32>
    %c0_5 = arith.constant 0 : index
    %c1 = arith.constant 1 : index
    %c0_6 = arith.constant 0 : index
    %5 = vector.load %arg2[%c0_5, %c1, %c0_6] : memref<1x80x5xbf16, #tpu.memory_space<vmem>>, vector<1x79x5xbf16>
    %6 = vector.shape_cast %5 : vector<1x79x5xbf16> to vector<79x5xbf16>
    %c1_7 = arith.constant 1 : index
    %c0_8 = arith.constant 0 : index
    %c0_9 = arith.constant 0 : index
    %7 = vector.load %arg3[%c1_7, %c0_8, %c0_9] : memref<2x5x4xbf16, #tpu.memory_space<vmem>>, vector<1x5x4xbf16>
    %8 = vector.shape_cast %7 : vector<1x5x4xbf16> to vector<5x4xbf16>
    %cst_10 = arith.constant dense<0.000000e+00> : vector<79x4xf32>
    %9 = tpu.matmul %6, %8, %cst_10 {dimension_numbers = #tpu.dot_dimension_numbers<[1], [0], [0], [1], [0, 0, 1, 1], [], []>} : vector<79x5xbf16>, vector<5x4xbf16>, vector<79x4xf32> -> vector<79x4xf32>
    %10 = arith.addf %4, %9 : vector<79x4xf32>
    %cst_11 = arith.constant 5.000000e-01 : f32
    %11 = vector.broadcast %cst_11 : f32 to vector<79x4xf32>
    %12 = arith.mulf %11, %10 : vector<79x4xf32>
    %cst_12 = arith.constant 4.471500e-02 : f32
    %13 = vector.broadcast %cst_12 : f32 to vector<79x4xf32>
    %14 = arith.mulf %13, %10 : vector<79x4xf32>
    %15 = arith.mulf %14, %10 : vector<79x4xf32>
    %16 = arith.mulf %15, %10 : vector<79x4xf32>
    %17 = arith.addf %10, %16 : vector<79x4xf32>
    %cst_13 = arith.constant 0.797884583 : f32
    %18 = vector.broadcast %cst_13 : f32 to vector<79x4xf32>
    %19 = arith.mulf %18, %17 : vector<79x4xf32>
    %20 = math.tanh %19 : vector<79x4xf32>
    %cst_14 = arith.constant 1.000000e+00 : f32
    %21 = vector.broadcast %cst_14 : f32 to vector<79x4xf32>
    %22 = arith.addf %21, %20 : vector<79x4xf32>
    %23 = arith.mulf %12, %22 : vector<79x4xf32>
    %24 = arith.truncf %23 : vector<79x4xf32> to vector<79x4xbf16>
    %c0_15 = arith.constant 0 : index
    %c0_16 = arith.constant 0 : index
    %c0_17 = arith.constant 0 : index
    %25 = vector.load %arg4[%c0_15, %c0_16, %c0_17] : memref<1x79x4xbf16, #tpu.memory_space<vmem>>, vector<1x79x4xbf16>
    %26 = vector.shape_cast %25 : vector<1x79x4xbf16> to vector<79x4xbf16>
    %27 = vector.shape_cast %24 : vector<79x4xbf16> to vector<1x79x4xbf16>
    tpu.vector_store %arg4[%c0_15, %c0_16, %c0_17], %27 {strides = array<i32>} : memref<1x79x4xbf16, #tpu.memory_space<vmem>>, vector<1x79x4xbf16>,
    return
  }
  func.func @transform_0(%arg0: i32, %arg1: i32) -> (i32, i32, i32) {
    %c0_i32 = arith.constant 0 : i32
    %c0_i32_0 = arith.constant 0 : i32
    %c0_i32_1 = arith.constant 0 : i32
    return %arg0, %c0_i32, %c0_i32_0 : i32, i32, i32
  }
  func.func @transform_1(%arg0: i32, %arg1: i32) -> (i32, i32, i32) {
    %c0_i32 = arith.constant 0 : i32
    %c0_i32_0 = arith.constant 0 : i32
    %c0_i32_1 = arith.constant 0 : i32
    return %c0_i32, %c0_i32_0, %arg1 : i32, i32, i32
  }
  func.func @transform_2(%arg0: i32, %arg1: i32) -> (i32, i32, i32) {
    %c0_i32 = arith.constant 0 : i32
    %c0_i32_0 = arith.constant 0 : i32
    return %arg0, %c0_i32, %arg1 : i32, i32, i32
  }
}

module attributes {stable_mosaic.version = 11 : i64} {
  func.func @kernel(%arg0: i32, %arg1: i32, %arg2: memref<1x40x8xbf16, #tpu.memory_space<vmem>>, %arg3: memref<2x8x8xbf16, #tpu.memory_space<vmem>>, %arg4: memref<1x39x8xbf16, #tpu.memory_space<vmem>>) attributes {dimension_semantics = [#tpu.dimension_semantics<parallel>, #tpu.dimension_semantics<parallel>], iteration_bounds = array<i64: 2, 1>, scalar_prefetch = 0 : i64, scratch_operands = 0 : i64, tpu.core_type = #tpu.core_type<tc>, window_params = [{transform_indices = @transform_0, window_bounds = array<i64: 1, 40, 8>}, {transform_indices = @transform_1, window_bounds = array<i64: 2, 8, 8>}, {transform_indices = @transform_2, window_bounds = array<i64: 1, 39, 8>}]} {
    %c0 = arith.constant 0 : index
    %c0_0 = arith.constant 0 : index
    %c0_1 = arith.constant 0 : index
    %0 = vector.load %arg2[%c0, %c0_0, %c0_1] : memref<1x40x8xbf16, #tpu.memory_space<vmem>>, vector<1x39x8xbf16>
    %1 = vector.shape_cast %0 : vector<1x39x8xbf16> to vector<39x8xbf16>
    %c0_2 = arith.constant 0 : index
    %c0_3 = arith.constant 0 : index
    %c0_4 = arith.constant 0 : index
    %2 = vector.load %arg3[%c0_2, %c0_3, %c0_4] : memref<2x8x8xbf16, #tpu.memory_space<vmem>>, vector<1x8x8xbf16>
    %3 = vector.shape_cast %2 : vector<1x8x8xbf16> to vector<8x8xbf16>
    %cst = arith.constant dense<0.000000e+00> : vector<39x8xf32>
    %4 = tpu.matmul %1, %3, %cst {dimension_numbers = #tpu.dot_dimension_numbers<[1], [0], [0], [1], [0, 0, 1, 1], [], []>} : vector<39x8xbf16>, vector<8x8xbf16>, vector<39x8xf32> -> vector<39x8xf32>
    %c0_5 = arith.constant 0 : index
    %c1 = arith.constant 1 : index
    %c0_6 = arith.constant 0 : index
    %5 = vector.load %arg2[%c0_5, %c1, %c0_6] : memref<1x40x8xbf16, #tpu.memory_space<vmem>>, vector<1x39x8xbf16>
    %6 = vector.shape_cast %5 : vector<1x39x8xbf16> to vector<39x8xbf16>
    %c1_7 = arith.constant 1 : index
    %c0_8 = arith.constant 0 : index
    %c0_9 = arith.constant 0 : index
    %7 = vector.load %arg3[%c1_7, %c0_8, %c0_9] : memref<2x8x8xbf16, #tpu.memory_space<vmem>>, vector<1x8x8xbf16>
    %8 = vector.shape_cast %7 : vector<1x8x8xbf16> to vector<8x8xbf16>
    %cst_10 = arith.constant dense<0.000000e+00> : vector<39x8xf32>
    %9 = tpu.matmul %6, %8, %cst_10 {dimension_numbers = #tpu.dot_dimension_numbers<[1], [0], [0], [1], [0, 0, 1, 1], [], []>} : vector<39x8xbf16>, vector<8x8xbf16>, vector<39x8xf32> -> vector<39x8xf32>
    %10 = arith.addf %4, %9 : vector<39x8xf32>
    %cst_11 = arith.constant 5.000000e-01 : f32
    %11 = vector.broadcast %cst_11 : f32 to vector<39x8xf32>
    %12 = arith.mulf %11, %10 : vector<39x8xf32>
    %cst_12 = arith.constant 4.471500e-02 : f32
    %13 = vector.broadcast %cst_12 : f32 to vector<39x8xf32>
    %14 = arith.mulf %13, %10 : vector<39x8xf32>
    %15 = arith.mulf %14, %10 : vector<39x8xf32>
    %16 = arith.mulf %15, %10 : vector<39x8xf32>
    %17 = arith.addf %10, %16 : vector<39x8xf32>
    %cst_13 = arith.constant 0.797884583 : f32
    %18 = vector.broadcast %cst_13 : f32 to vector<39x8xf32>
    %19 = arith.mulf %18, %17 : vector<39x8xf32>
    %20 = math.tanh %19 : vector<39x8xf32>
    %cst_14 = arith.constant 1.000000e+00 : f32
    %21 = vector.broadcast %cst_14 : f32 to vector<39x8xf32>
    %22 = arith.addf %21, %20 : vector<39x8xf32>
    %23 = arith.mulf %12, %22 : vector<39x8xf32>
    %24 = arith.truncf %23 : vector<39x8xf32> to vector<39x8xbf16>
    %c0_15 = arith.constant 0 : index
    %c0_16 = arith.constant 0 : index
    %c0_17 = arith.constant 0 : index
    %25 = vector.load %arg4[%c0_15, %c0_16, %c0_17] : memref<1x39x8xbf16, #tpu.memory_space<vmem>>, vector<1x39x8xbf16>
    %26 = vector.shape_cast %25 : vector<1x39x8xbf16> to vector<39x8xbf16>
    %27 = vector.shape_cast %24 : vector<39x8xbf16> to vector<1x39x8xbf16>
    tpu.vector_store %arg4[%c0_15, %c0_16, %c0_17], %27 {strides = array<i32>} : memref<1x39x8xbf16, #tpu.memory_space<vmem>>, vector<1x39x8xbf16>,
    return
  }
  func.func @transform_0(%arg0: i32, %arg1: i32) -> (i32, i32, i32) {
    %c0_i32 = arith.constant 0 : i32
    %c0_i32_0 = arith.constant 0 : i32
    %c0_i32_1 = arith.constant 0 : i32
    return %arg0, %c0_i32, %c0_i32_0 : i32, i32, i32
  }
  func.func @transform_1(%arg0: i32, %arg1: i32) -> (i32, i32, i32) {
    %c0_i32 = arith.constant 0 : i32
    %c0_i32_0 = arith.constant 0 : i32
    %c0_i32_1 = arith.constant 0 : i32
    return %c0_i32, %c0_i32_0, %arg1 : i32, i32, i32
  }
  func.func @transform_2(%arg0: i32, %arg1: i32) -> (i32, i32, i32) {
    %c0_i32 = arith.constant 0 : i32
    %c0_i32_0 = arith.constant 0 : i32
    return %arg0, %c0_i32, %arg1 : i32, i32, i32
  }
}

module attributes {stable_mosaic.version = 11 : i64} {
  func.func @kernel(%arg0: i32, %arg1: i32, %arg2: memref<1x20x16xbf16, #tpu.memory_space<vmem>>, %arg3: memref<2x16x16xbf16, #tpu.memory_space<vmem>>, %arg4: memref<1x19x16xbf16, #tpu.memory_space<vmem>>) attributes {dimension_semantics = [#tpu.dimension_semantics<parallel>, #tpu.dimension_semantics<parallel>], iteration_bounds = array<i64: 2, 1>, scalar_prefetch = 0 : i64, scratch_operands = 0 : i64, tpu.core_type = #tpu.core_type<tc>, window_params = [{transform_indices = @transform_0, window_bounds = array<i64: 1, 20, 16>}, {transform_indices = @transform_1, window_bounds = array<i64: 2, 16, 16>}, {transform_indices = @transform_2, window_bounds = array<i64: 1, 19, 16>}]} {
    %c0 = arith.constant 0 : index
    %c0_0 = arith.constant 0 : index
    %c0_1 = arith.constant 0 : index
    %0 = vector.load %arg2[%c0, %c0_0, %c0_1] : memref<1x20x16xbf16, #tpu.memory_space<vmem>>, vector<1x19x16xbf16>
    %1 = vector.shape_cast %0 : vector<1x19x16xbf16> to vector<19x16xbf16>
    %c0_2 = arith.constant 0 : index
    %c0_3 = arith.constant 0 : index
    %c0_4 = arith.constant 0 : index
    %2 = vector.load %arg3[%c0_2, %c0_3, %c0_4] : memref<2x16x16xbf16, #tpu.memory_space<vmem>>, vector<1x16x16xbf16>
    %3 = vector.shape_cast %2 : vector<1x16x16xbf16> to vector<16x16xbf16>
    %cst = arith.constant dense<0.000000e+00> : vector<19x16xf32>
    %4 = tpu.matmul %1, %3, %cst {dimension_numbers = #tpu.dot_dimension_numbers<[1], [0], [0], [1], [0, 0, 1, 1], [], []>} : vector<19x16xbf16>, vector<16x16xbf16>, vector<19x16xf32> -> vector<19x16xf32>
    %c0_5 = arith.constant 0 : index
    %c1 = arith.constant 1 : index
    %c0_6 = arith.constant 0 : index
    %5 = vector.load %arg2[%c0_5, %c1, %c0_6] : memref<1x20x16xbf16, #tpu.memory_space<vmem>>, vector<1x19x16xbf16>
    %6 = vector.shape_cast %5 : vector<1x19x16xbf16> to vector<19x16xbf16>
    %c1_7 = arith.constant 1 : index
    %c0_8 = arith.constant 0 : index
    %c0_9 = arith.constant 0 : index
    %7 = vector.load %arg3[%c1_7, %c0_8, %c0_9] : memref<2x16x16xbf16, #tpu.memory_space<vmem>>, vector<1x16x16xbf16>
    %8 = vector.shape_cast %7 : vector<1x16x16xbf16> to vector<16x16xbf16>
    %cst_10 = arith.constant dense<0.000000e+00> : vector<19x16xf32>
    %9 = tpu.matmul %6, %8, %cst_10 {dimension_numbers = #tpu.dot_dimension_numbers<[1], [0], [0], [1], [0, 0, 1, 1], [], []>} : vector<19x16xbf16>, vector<16x16xbf16>, vector<19x16xf32> -> vector<19x16xf32>
    %10 = arith.addf %4, %9 : vector<19x16xf32>
    %cst_11 = arith.constant 5.000000e-01 : f32
    %11 = vector.broadcast %cst_11 : f32 to vector<19x16xf32>
    %12 = arith.mulf %11, %10 : vector<19x16xf32>
    %cst_12 = arith.constant 4.471500e-02 : f32
    %13 = vector.broadcast %cst_12 : f32 to vector<19x16xf32>
    %14 = arith.mulf %13, %10 : vector<19x16xf32>
    %15 = arith.mulf %14, %10 : vector<19x16xf32>
    %16 = arith.mulf %15, %10 : vector<19x16xf32>
    %17 = arith.addf %10, %16 : vector<19x16xf32>
    %cst_13 = arith.constant 0.797884583 : f32
    %18 = vector.broadcast %cst_13 : f32 to vector<19x16xf32>
    %19 = arith.mulf %18, %17 : vector<19x16xf32>
    %20 = math.tanh %19 : vector<19x16xf32>
    %cst_14 = arith.constant 1.000000e+00 : f32
    %21 = vector.broadcast %cst_14 : f32 to vector<19x16xf32>
    %22 = arith.addf %21, %20 : vector<19x16xf32>
    %23 = arith.mulf %12, %22 : vector<19x16xf32>
    %24 = arith.truncf %23 : vector<19x16xf32> to vector<19x16xbf16>
    %c0_15 = arith.constant 0 : index
    %c0_16 = arith.constant 0 : index
    %c0_17 = arith.constant 0 : index
    %25 = vector.load %arg4[%c0_15, %c0_16, %c0_17] : memref<1x19x16xbf16, #tpu.memory_space<vmem>>, vector<1x19x16xbf16>
    %26 = vector.shape_cast %25 : vector<1x19x16xbf16> to vector<19x16xbf16>
    %27 = vector.shape_cast %24 : vector<19x16xbf16> to vector<1x19x16xbf16>
    tpu.vector_store %arg4[%c0_15, %c0_16, %c0_17], %27 {strides = array<i32>} : memref<1x19x16xbf16, #tpu.memory_space<vmem>>, vector<1x19x16xbf16>,
    return
  }
  func.func @transform_0(%arg0: i32, %arg1: i32) -> (i32, i32, i32) {
    %c0_i32 = arith.constant 0 : i32
    %c0_i32_0 = arith.constant 0 : i32
    %c0_i32_1 = arith.constant 0 : i32
    return %arg0, %c0_i32, %c0_i32_0 : i32, i32, i32
  }
  func.func @transform_1(%arg0: i32, %arg1: i32) -> (i32, i32, i32) {
    %c0_i32 = arith.constant 0 : i32
    %c0_i32_0 = arith.constant 0 : i32
    %c0_i32_1 = arith.constant 0 : i32
    return %c0_i32, %c0_i32_0, %arg1 : i32, i32, i32
  }
  func.func @transform_2(%arg0: i32, %arg1: i32) -> (i32, i32, i32) {
    %c0_i32 = arith.constant 0 : i32
    %c0_i32_0 = arith.constant 0 : i32
    return %arg0, %c0_i32, %arg1 : i32, i32, i32
  }
}

module attributes {stable_mosaic.version = 11 : i64} {
  func.func @kernel(%arg0: i32, %arg1: i32, %arg2: memref<1x10x32xbf16, #tpu.memory_space<vmem>>, %arg3: memref<2x32x32xbf16, #tpu.memory_space<vmem>>, %arg4: memref<1x9x32xbf16, #tpu.memory_space<vmem>>) attributes {dimension_semantics = [#tpu.dimension_semantics<parallel>, #tpu.dimension_semantics<parallel>], iteration_bounds = array<i64: 2, 1>, scalar_prefetch = 0 : i64, scratch_operands = 0 : i64, tpu.core_type = #tpu.core_type<tc>, window_params = [{transform_indices = @transform_0, window_bounds = array<i64: 1, 10, 32>}, {transform_indices = @transform_1, window_bounds = array<i64: 2, 32, 32>}, {transform_indices = @transform_2, window_bounds = array<i64: 1, 9, 32>}]} {
    %c0 = arith.constant 0 : index
    %c0_0 = arith.constant 0 : index
    %c0_1 = arith.constant 0 : index
    %0 = vector.load %arg2[%c0, %c0_0, %c0_1] : memref<1x10x32xbf16, #tpu.memory_space<vmem>>, vector<1x9x32xbf16>
    %1 = vector.shape_cast %0 : vector<1x9x32xbf16> to vector<9x32xbf16>
    %c0_2 = arith.constant 0 : index
    %c0_3 = arith.constant 0 : index
    %c0_4 = arith.constant 0 : index
    %2 = vector.load %arg3[%c0_2, %c0_3, %c0_4] : memref<2x32x32xbf16, #tpu.memory_space<vmem>>, vector<1x32x32xbf16>
    %3 = vector.shape_cast %2 : vector<1x32x32xbf16> to vector<32x32xbf16>
    %cst = arith.constant dense<0.000000e+00> : vector<9x32xf32>
    %4 = tpu.matmul %1, %3, %cst {dimension_numbers = #tpu.dot_dimension_numbers<[1], [0], [0], [1], [0, 0, 1, 1], [], []>} : vector<9x32xbf16>, vector<32x32xbf16>, vector<9x32xf32> -> vector<9x32xf32>
    %c0_5 = arith.constant 0 : index
    %c1 = arith.constant 1 : index
    %c0_6 = arith.constant 0 : index
    %5 = vector.load %arg2[%c0_5, %c1, %c0_6] : memref<1x10x32xbf16, #tpu.memory_space<vmem>>, vector<1x9x32xbf16>
    %6 = vector.shape_cast %5 : vector<1x9x32xbf16> to vector<9x32xbf16>
    %c1_7 = arith.constant 1 : index
    %c0_8 = arith.constant 0 : index
    %c0_9 = arith.constant 0 : index
    %7 = vector.load %arg3[%c1_7, %c0_8, %c0_9] : memref<2x32x32xbf16, #tpu.memory_space<vmem>>, vector<1x32x32xbf16>
    %8 = vector.shape_cast %7 : vector<1x32x32xbf16> to vector<32x32xbf16>
    %cst_10 = arith.constant dense<0.000000e+00> : vector<9x32xf32>
    %9 = tpu.matmul %6, %8, %cst_10 {dimension_numbers = #tpu.dot_dimension_numbers<[1], [0], [0], [1], [0, 0, 1, 1], [], []>} : vector<9x32xbf16>, vector<32x32xbf16>, vector<9x32xf32> -> vector<9x32xf32>
    %10 = arith.addf %4, %9 : vector<9x32xf32>
    %cst_11 = arith.constant 5.000000e-01 : f32
    %11 = vector.broadcast %cst_11 : f32 to vector<9x32xf32>
    %12 = arith.mulf %11, %10 : vector<9x32xf32>
    %cst_12 = arith.constant 4.471500e-02 : f32
    %13 = vector.broadcast %cst_12 : f32 to vector<9x32xf32>
    %14 = arith.mulf %13, %10 : vector<9x32xf32>
    %15 = arith.mulf %14, %10 : vector<9x32xf32>
    %16 = arith.mulf %15, %10 : vector<9x32xf32>
    %17 = arith.addf %10, %16 : vector<9x32xf32>
    %cst_13 = arith.constant 0.797884583 : f32
    %18 = vector.broadcast %cst_13 : f32 to vector<9x32xf32>
    %19 = arith.mulf %18, %17 : vector<9x32xf32>
    %20 = math.tanh %19 : vector<9x32xf32>
    %cst_14 = arith.constant 1.000000e+00 : f32
    %21 = vector.broadcast %cst_14 : f32 to vector<9x32xf32>
    %22 = arith.addf %21, %20 : vector<9x32xf32>
    %23 = arith.mulf %12, %22 : vector<9x32xf32>
    %24 = arith.truncf %23 : vector<9x32xf32> to vector<9x32xbf16>
    %c0_15 = arith.constant 0 : index
    %c0_16 = arith.constant 0 : index
    %c0_17 = arith.constant 0 : index
    %25 = vector.load %arg4[%c0_15, %c0_16, %c0_17] : memref<1x9x32xbf16, #tpu.memory_space<vmem>>, vector<1x9x32xbf16>
    %26 = vector.shape_cast %25 : vector<1x9x32xbf16> to vector<9x32xbf16>
    %27 = vector.shape_cast %24 : vector<9x32xbf16> to vector<1x9x32xbf16>
    tpu.vector_store %arg4[%c0_15, %c0_16, %c0_17], %27 {strides = array<i32>} : memref<1x9x32xbf16, #tpu.memory_space<vmem>>, vector<1x9x32xbf16>,
    return
  }
  func.func @transform_0(%arg0: i32, %arg1: i32) -> (i32, i32, i32) {
    %c0_i32 = arith.constant 0 : i32
    %c0_i32_0 = arith.constant 0 : i32
    %c0_i32_1 = arith.constant 0 : i32
    return %arg0, %c0_i32, %c0_i32_0 : i32, i32, i32
  }
  func.func @transform_1(%arg0: i32, %arg1: i32) -> (i32, i32, i32) {
    %c0_i32 = arith.constant 0 : i32
    %c0_i32_0 = arith.constant 0 : i32
    %c0_i32_1 = arith.constant 0 : i32
    return %c0_i32, %c0_i32_0, %arg1 : i32, i32, i32
  }
  func.func @transform_2(%arg0: i32, %arg1: i32) -> (i32, i32, i32) {
    %c0_i32 = arith.constant 0 : i32
    %c0_i32_0 = arith.constant 0 : i32
    return %arg0, %c0_i32, %arg1 : i32, i32, i32
  }
}

module attributes {stable_mosaic.version = 11 : i64} {
  func.func @kernel(%arg0: i32, %arg1: i32, %arg2: memref<1x5x64xbf16, #tpu.memory_space<vmem>>, %arg3: memref<2x64x32xbf16, #tpu.memory_space<vmem>>, %arg4: memref<1x4x32xbf16, #tpu.memory_space<vmem>>) attributes {dimension_semantics = [#tpu.dimension_semantics<parallel>, #tpu.dimension_semantics<parallel>], iteration_bounds = array<i64: 2, 1>, scalar_prefetch = 0 : i64, scratch_operands = 0 : i64, tpu.core_type = #tpu.core_type<tc>, window_params = [{transform_indices = @transform_0, window_bounds = array<i64: 1, 5, 64>}, {transform_indices = @transform_1, window_bounds = array<i64: 2, 64, 32>}, {transform_indices = @transform_2, window_bounds = array<i64: 1, 4, 32>}]} {
    %c0 = arith.constant 0 : index
    %c0_0 = arith.constant 0 : index
    %c0_1 = arith.constant 0 : index
    %0 = vector.load %arg2[%c0, %c0_0, %c0_1] : memref<1x5x64xbf16, #tpu.memory_space<vmem>>, vector<1x4x64xbf16>
    %1 = vector.shape_cast %0 : vector<1x4x64xbf16> to vector<4x64xbf16>
    %c0_2 = arith.constant 0 : index
    %c0_3 = arith.constant 0 : index
    %c0_4 = arith.constant 0 : index
    %2 = vector.load %arg3[%c0_2, %c0_3, %c0_4] : memref<2x64x32xbf16, #tpu.memory_space<vmem>>, vector<1x64x32xbf16>
    %3 = vector.shape_cast %2 : vector<1x64x32xbf16> to vector<64x32xbf16>
    %cst = arith.constant dense<0.000000e+00> : vector<4x32xf32>
    %4 = tpu.matmul %1, %3, %cst {dimension_numbers = #tpu.dot_dimension_numbers<[1], [0], [0], [1], [0, 0, 1, 1], [], []>} : vector<4x64xbf16>, vector<64x32xbf16>, vector<4x32xf32> -> vector<4x32xf32>
    %c0_5 = arith.constant 0 : index
    %c1 = arith.constant 1 : index
    %c0_6 = arith.constant 0 : index
    %5 = vector.load %arg2[%c0_5, %c1, %c0_6] : memref<1x5x64xbf16, #tpu.memory_space<vmem>>, vector<1x4x64xbf16>
    %6 = vector.shape_cast %5 : vector<1x4x64xbf16> to vector<4x64xbf16>
    %c1_7 = arith.constant 1 : index
    %c0_8 = arith.constant 0 : index
    %c0_9 = arith.constant 0 : index
    %7 = vector.load %arg3[%c1_7, %c0_8, %c0_9] : memref<2x64x32xbf16, #tpu.memory_space<vmem>>, vector<1x64x32xbf16>
    %8 = vector.shape_cast %7 : vector<1x64x32xbf16> to vector<64x32xbf16>
    %cst_10 = arith.constant dense<0.000000e+00> : vector<4x32xf32>
    %9 = tpu.matmul %6, %8, %cst_10 {dimension_numbers = #tpu.dot_dimension_numbers<[1], [0], [0], [1], [0, 0, 1, 1], [], []>} : vector<4x64xbf16>, vector<64x32xbf16>, vector<4x32xf32> -> vector<4x32xf32>
    %10 = arith.addf %4, %9 : vector<4x32xf32>
    %cst_11 = arith.constant 5.000000e-01 : f32
    %11 = vector.broadcast %cst_11 : f32 to vector<4x32xf32>
    %12 = arith.mulf %11, %10 : vector<4x32xf32>
    %cst_12 = arith.constant 4.471500e-02 : f32
    %13 = vector.broadcast %cst_12 : f32 to vector<4x32xf32>
    %14 = arith.mulf %13, %10 : vector<4x32xf32>
    %15 = arith.mulf %14, %10 : vector<4x32xf32>
    %16 = arith.mulf %15, %10 : vector<4x32xf32>
    %17 = arith.addf %10, %16 : vector<4x32xf32>
    %cst_13 = arith.constant 0.797884583 : f32
    %18 = vector.broadcast %cst_13 : f32 to vector<4x32xf32>
    %19 = arith.mulf %18, %17 : vector<4x32xf32>
    %20 = math.tanh %19 : vector<4x32xf32>
    %cst_14 = arith.constant 1.000000e+00 : f32
    %21 = vector.broadcast %cst_14 : f32 to vector<4x32xf32>
    %22 = arith.addf %21, %20 : vector<4x32xf32>
    %23 = arith.mulf %12, %22 : vector<4x32xf32>
    %24 = arith.truncf %23 : vector<4x32xf32> to vector<4x32xbf16>
    %c0_15 = arith.constant 0 : index
    %c0_16 = arith.constant 0 : index
    %c0_17 = arith.constant 0 : index
    %25 = vector.load %arg4[%c0_15, %c0_16, %c0_17] : memref<1x4x32xbf16, #tpu.memory_space<vmem>>, vector<1x4x32xbf16>
    %26 = vector.shape_cast %25 : vector<1x4x32xbf16> to vector<4x32xbf16>
    %27 = vector.shape_cast %24 : vector<4x32xbf16> to vector<1x4x32xbf16>
    tpu.vector_store %arg4[%c0_15, %c0_16, %c0_17], %27 {strides = array<i32>} : memref<1x4x32xbf16, #tpu.memory_space<vmem>>, vector<1x4x32xbf16>,
    return
  }
  func.func @transform_0(%arg0: i32, %arg1: i32) -> (i32, i32, i32) {
    %c0_i32 = arith.constant 0 : i32
    %c0_i32_0 = arith.constant 0 : i32
    %c0_i32_1 = arith.constant 0 : i32
    return %arg0, %c0_i32, %c0_i32_0 : i32, i32, i32
  }
  func.func @transform_1(%arg0: i32, %arg1: i32) -> (i32, i32, i32) {
    %c0_i32 = arith.constant 0 : i32
    %c0_i32_0 = arith.constant 0 : i32
    %c0_i32_1 = arith.constant 0 : i32
    return %c0_i32, %c0_i32_0, %arg1 : i32, i32, i32
  }
  func.func @transform_2(%arg0: i32, %arg1: i32) -> (i32, i32, i32) {
    %c0_i32 = arith.constant 0 : i32
    %c0_i32_0 = arith.constant 0 : i32
    return %arg0, %c0_i32, %arg1 : i32, i32, i32
  }
}

module attributes {stable_mosaic.version = 11 : i64} {
  func.func @kernel(%arg0: i32, %arg1: i32, %arg2: memref<1x2x64xbf16, #tpu.memory_space<vmem>>, %arg3: memref<1x64x32xbf16, #tpu.memory_space<vmem>>, %arg4: memref<1x2x32xf32, #tpu.memory_space<vmem>>) attributes {dimension_semantics = [#tpu.dimension_semantics<parallel>, #tpu.dimension_semantics<parallel>], iteration_bounds = array<i64: 2, 1>, scalar_prefetch = 0 : i64, scratch_operands = 0 : i64, tpu.core_type = #tpu.core_type<tc>, window_params = [{transform_indices = @transform_0, window_bounds = array<i64: 1, 2, 64>}, {transform_indices = @transform_1, window_bounds = array<i64: 1, 64, 32>}, {transform_indices = @transform_2, window_bounds = array<i64: 1, 2, 32>}]} {
    %c0 = arith.constant 0 : index
    %c0_0 = arith.constant 0 : index
    %c0_1 = arith.constant 0 : index
    %0 = vector.load %arg2[%c0, %c0_0, %c0_1] : memref<1x2x64xbf16, #tpu.memory_space<vmem>>, vector<1x2x64xbf16>
    %1 = vector.shape_cast %0 : vector<1x2x64xbf16> to vector<2x64xbf16>
    %c0_2 = arith.constant 0 : index
    %c0_3 = arith.constant 0 : index
    %c0_4 = arith.constant 0 : index
    %2 = vector.load %arg3[%c0_2, %c0_3, %c0_4] : memref<1x64x32xbf16, #tpu.memory_space<vmem>>, vector<1x64x32xbf16>
    %3 = vector.shape_cast %2 : vector<1x64x32xbf16> to vector<64x32xbf16>
    %cst = arith.constant dense<0.000000e+00> : vector<2x32xf32>
    %4 = tpu.matmul %1, %3, %cst {dimension_numbers = #tpu.dot_dimension_numbers<[1], [0], [0], [1], [0, 0, 1, 1], [], []>} : vector<2x64xbf16>, vector<64x32xbf16>, vector<2x32xf32> -> vector<2x32xf32>
    %cst_5 = arith.constant 5.000000e-01 : f32
    %5 = vector.broadcast %cst_5 : f32 to vector<2x32xf32>
    %6 = arith.mulf %5, %4 : vector<2x32xf32>
    %cst_6 = arith.constant 4.471500e-02 : f32
    %7 = vector.broadcast %cst_6 : f32 to vector<2x32xf32>
    %8 = arith.mulf %7, %4 : vector<2x32xf32>
    %9 = arith.mulf %8, %4 : vector<2x32xf32>
    %10 = arith.mulf %9, %4 : vector<2x32xf32>
    %11 = arith.addf %4, %10 : vector<2x32xf32>
    %cst_7 = arith.constant 0.797884583 : f32
    %12 = vector.broadcast %cst_7 : f32 to vector<2x32xf32>
    %13 = arith.mulf %12, %11 : vector<2x32xf32>
    %14 = math.tanh %13 : vector<2x32xf32>
    %cst_8 = arith.constant 1.000000e+00 : f32
    %15 = vector.broadcast %cst_8 : f32 to vector<2x32xf32>
    %16 = arith.addf %15, %14 : vector<2x32xf32>
    %17 = arith.mulf %6, %16 : vector<2x32xf32>
    %c0_9 = arith.constant 0 : index
    %c0_10 = arith.constant 0 : index
    %c0_11 = arith.constant 0 : index
    %18 = vector.load %arg4[%c0_9, %c0_10, %c0_11] : memref<1x2x32xf32, #tpu.memory_space<vmem>>, vector<1x2x32xf32>
    %19 = vector.shape_cast %18 : vector<1x2x32xf32> to vector<2x32xf32>
    %20 = vector.shape_cast %17 : vector<2x32xf32> to vector<1x2x32xf32>
    tpu.vector_store %arg4[%c0_9, %c0_10, %c0_11], %20 {strides = array<i32>} : memref<1x2x32xf32, #tpu.memory_space<vmem>>, vector<1x2x32xf32>,
    return
  }
  func.func @transform_0(%arg0: i32, %arg1: i32) -> (i32, i32, i32) {
    %c0_i32 = arith.constant 0 : i32
    %c0_i32_0 = arith.constant 0 : i32
    %c0_i32_1 = arith.constant 0 : i32
    return %arg0, %c0_i32, %c0_i32_0 : i32, i32, i32
  }
  func.func @transform_1(%arg0: i32, %arg1: i32) -> (i32, i32, i32) {
    %c0_i32 = arith.constant 0 : i32
    %c0_i32_0 = arith.constant 0 : i32
    %c0_i32_1 = arith.constant 0 : i32
    return %c0_i32, %c0_i32_0, %arg1 : i32, i32, i32
  }
  func.func @transform_2(%arg0: i32, %arg1: i32) -> (i32, i32, i32) {
    %c0_i32 = arith.constant 0 : i32
    %c0_i32_0 = arith.constant 0 : i32
    return %arg0, %c0_i32, %arg1 : i32, i32, i32
  }
}

</mosaic_0001>

<llo_original>
// kernel: _lambda_.7
$region0: #{_lambda_.7}
  #allocation0 [shape = 'u32[]', space=smem, size = 0x4, offset = 0x4, fixed_abs, tag = 'smem constant byte address 0x4 - core index']
  #allocation1 [shape = 'u32[144,128]{1,0:T(1,128)}', space=vmem, size = 0x12000, scoped, tag = 'internal scratch']
  %s0 = inlined_call_operand.vmem [shape: bf16[2,40,8], index: 0, kind: input, shape index: {}]
  %s1 = inlined_call_operand.vmem [shape: bf16[2,8,8], index: 1, kind: input, shape index: {}]
  %s2 = inlined_call_operand.vmem [shape: bf16[2,39,8], index: 2, kind: output, shape index: {}]
  %s3 = sld [smem:[#allocation0]]
  $region41: #{_lambda_.7} parent=0
    _
  %s5 = ssub.s32 1, %s3
  %s6 = scalar_select 0, %s5, %s3
  loop: start=0, step=1, limit=4
  $region2: #{_lambda_.7} parent=0 // loop_pre_header
    _
  $region3: #{_lambda_.7} parent=0 // loop_header
    %s8 = sphi 0, %s12
    %p9 = scmp.ge.s32.totalorder %s8, 4
    %s15 = sphi 0, %s27
    %s16 = sphi 0, %s23
    %s17 = sphi 0, %s15
    %s18 = sphi 0, %s16
    %s19 = sphi 0, %s17
    %s20 = sphi 0, %s18
    %s30 = sphi 0, %s32
    %s33 = sphi 0, %s30
    %s34 = sphi 0, %s33
    %s50 = sphi 0, %s34
    %s56 = sphi 0, %s58
    %s59 = sphi 0, %s56
    %s60 = sphi 0, %s59
    %s76 = sphi 0, %s60
    %s84 = sphi 0, %s86
    %s87 = sphi 0, %s84
    %s88 = sphi 0, %s87
    %s104 = sphi 0, %s88
  $region4: #{_lambda_.7} parent=0 // loop_header_branch
    %11 = sbr.rel (%p9) target = $region8
  $region5: #{_lambda_.7} parent=0 // loop_body
    %s13 = ssub.s32 %s8, 1
    %s14 = ssub.s32 %s8, 2
    %s21 = sadd.s32 1, %s16
    %p22 = scmp.ge.s32.totalorder %s21, 1
    %s23 = scalar_select %p22, 0, %s21
    %s24 = sadd.s32 1, %s15
    %s25 = scalar_select %p22, %s24, %s15
    %p26 = scmp.ge.s32.totalorder %s25, 2
    %s27 = scalar_select %p26, 0, %s25
    %s28 = ssub.s32 %s15, %s27
    %p29 = scmp.eq.s32.totalorder %s28, 0
    %s31 = sadd.s32 %s30, 1
    %s32 = scalar_select %p29, %s30, %s31
    %p35 = pneg %p29
    %p36 = scmp.eq.s32.totalorder %s8, 1
    %p37 = por %p35, %p36
    %p38 = scmp.ne.s32.totalorder %s30, %s33
    %p39 = scmp.eq.s32.totalorder %s8, 0
    %p40 = por %p38, %p39
    %p41 = scmp.ne.s32.totalorder %s30, %s33
    %p42 = scmp.eq.s32.totalorder %s13, 1
    %p43 = por %p41, %p42
    %p44 = scmp.ne.s32.totalorder %s33, %s34
    %p45 = scmp.eq.s32.totalorder %s13, 0
    %p46 = por %p44, %p45
    %p47 = scmp.ne.s32.totalorder %s33, %s34
    %p48 = scmp.eq.s32.totalorder %s14, 1
    %p49 = por %p47, %p48
    %p51 = scmp.ne.s32.totalorder %s34, %s50
    %p52 = scmp.eq.s32.totalorder %s14, 0
    %p53 = por %p51, %p52
    %s54 = ssub.s32 %s16, %s23
    %p55 = scmp.eq.s32.totalorder %s54, 0
    %s57 = sadd.s32 %s56, 1
    %s58 = scalar_select %p55, %s56, %s57
    %p61 = pneg %p55
    %p62 = scmp.eq.s32.totalorder %s8, 1
    %p63 = por %p61, %p62
    %p64 = scmp.ne.s32.totalorder %s56, %s59
    %p65 = scmp.eq.s32.totalorder %s8, 0
    %p66 = por %p64, %p65
    %p67 = scmp.ne.s32.totalorder %s56, %s59
    %p68 = scmp.eq.s32.totalorder %s13, 1
    %p69 = por %p67, %p68
    %p70 = scmp.ne.s32.totalorder %s59, %s60
    %p71 = scmp.eq.s32.totalorder %s13, 0
    %p72 = por %p70, %p71
    %p73 = scmp.ne.s32.totalorder %s59, %s60
    %p74 = scmp.eq.s32.totalorder %s14, 1
    %p75 = por %p73, %p74
    %p77 = scmp.ne.s32.totalorder %s60, %s76
    %p78 = scmp.eq.s32.totalorder %s14, 0
    %p79 = por %p77, %p78
    %s80 = ssub.s32 %s15, %s27
    %s81 = ssub.s32 %s16, %s23
    %s82 = sor.u32 %s80, %s81
    %p83 = scmp.eq.s32.totalorder %s82, 0
    %s85 = sadd.s32 %s84, 1
    %s86 = scalar_select %p83, %s84, %s85
    %p89 = pneg %p83
    %p90 = scmp.eq.s32.totalorder %s8, 1
    %p91 = por %p89, %p90
    %p92 = scmp.ne.s32.totalorder %s84, %s87
    %p93 = scmp.eq.s32.totalorder %s8, 0
    %p94 = por %p92, %p93
    %p95 = scmp.ne.s32.totalorder %s84, %s87
    %p96 = scmp.eq.s32.totalorder %s13, 1
    %p97 = por %p95, %p96
    %p98 = scmp.ne.s32.totalorder %s87, %s88
    %p99 = scmp.eq.s32.totalorder %s13, 0
    %p100 = por %p98, %p99
    %p101 = scmp.ne.s32.totalorder %s87, %s88
    %p102 = scmp.eq.s32.totalorder %s14, 1
    %p103 = por %p101, %p102
    %p105 = scmp.ne.s32.totalorder %s88, %s104
    %p106 = scmp.eq.s32.totalorder %s14, 0
    %p107 = por %p105, %p106
    %p108 = scmp.le.s32.totalorder 1, %s8
    %p109 = scmp.lt.s32.totalorder %s8, 3
    %p110 = pnand %p108, %p109
    %p111 = pneg %p110
    // Predicated region
    $region9: #{_lambda_.7} parent=5 // pred_check
      _
    $region10: #{_lambda_.7} parent=5 // pred_check_branch
      %113 = sbr.rel (%p110) target = $region12
    $region11: #{_lambda_.7} parent=5 // pred_region
      %s114 = ssub.s32 %s8, 1
      // Predicated region
      $region13: #{_lambda_.7} parent=11 // pred_check
        %p115 = pneg %p72
      $region14: #{_lambda_.7} parent=11 // pred_check_branch
        %117 = sbr.rel (%p115) target = $region16
      $region15: #{_lambda_.7} parent=11 // pred_region
        %p118 = scmp.lt.s32.totalorder %s18, 0
        %s119 = scalar_select %p118, %s18, 0
        %s120 = smul.addr %s119, 4
        %s121 = scalar_lea.vmem %s1, %s120
      $region16: #{_lambda_.7} parent=11 // pred_fallthru
        _
    $region12: #{_lambda_.7} parent=5 // pred_fallthru
      _
    %p122 = scmp.lt.s32.totalorder %s8, 2
    // Predicated region
    $region17: #{_lambda_.7} parent=5 // pred_check
      %p123 = pneg %p122
    $region18: #{_lambda_.7} parent=5 // pred_check_branch
      %125 = sbr.rel (%p123) target = $region20
    $region19: #{_lambda_.7} parent=5 // pred_region
      // Predicated region
      $region21: #{_lambda_.7} parent=19 // pred_check
        %p126 = pneg %p40
      $region22: #{_lambda_.7} parent=19 // pred_check_branch
        %128 = sbr.rel (%p126) target = $region24
      $region23: #{_lambda_.7} parent=19 // pred_region
        %p129 = scmp.lt.s32.totalorder %s15, 1
        %s130 = scalar_select %p129, %s15, 1
        %s131 = smul.addr %s130, 5
        %s132 = smul.addr %s131, 4
        %s133 = scalar_lea.vmem %s0, %s132
      $region24: #{_lambda_.7} parent=19 // pred_fallthru
        _
    $region20: #{_lambda_.7} parent=5 // pred_fallthru
      _
    %p134 = scmp.le.s32.totalorder 1, %s8
    %p135 = scmp.lt.s32.totalorder %s8, 3
    %p136 = pnand %p134, %p135
    %p137 = pneg %p136
    // Predicated region
    $region25: #{_lambda_.7} parent=5 // pred_check
      _
    $region26: #{_lambda_.7} parent=5 // pred_check_branch
      %139 = sbr.rel (%p136) target = $region28
    $region27: #{_lambda_.7} parent=5 // pred_region
      %s140 = ssub.s32 %s8, 1
      %p141 = scmp.lt.s32.totalorder %s17, 1
      %s142 = scalar_select %p141, %s17, 1
      %s143 = smul.addr %s142, 5
      %s144 = smul.addr %s143, 4
      %s145 = scalar_lea.vmem %s0, %s144
      %p146 = pneg %p46
      %p147 = pneg %p43
      %p148 = scmp.lt.s32.totalorder %s18, 0
      %s149 = scalar_select %p148, %s18, 0
      %s150 = smul.addr %s149, 4
      %s151 = scalar_lea.vmem %s1, %s150
      %p152 = pneg %p72
      %p153 = pneg %p69
      %p154 = pneg %p100
      %p155 = pneg %p97
      %p156 = scmp.lt.s32.totalorder %s17, 1
      %s157 = scalar_select %p156, %s17, 1
      %p158 = scmp.lt.s32.totalorder %s18, 0
      %s159 = scalar_select %p158, %s18, 0
      %s160 = smul.addr %s157, 5
      %s161 = sadd.s32 %s159, %s160
      %s162 = smul.addr %s161, 4
      %s163 = scalar_lea.vmem %s2, %s162
      %p164 = scmp.lt.s32.totalorder %s17, 1
      %s165 = scalar_select %p164, %s17, 1
      %s166 = smul.addr %s165, 5
      %s167 = smul.addr %s166, 4
      %s168 = scalar_lea.vmem %s0, %s167
      %p169 = scmp.lt.s32.totalorder %s18, 0
      %s170 = scalar_select %p169, %s18, 0
      %s171 = smul.addr %s170, 4
      %s172 = scalar_lea.vmem %s1, %s171
      %p173 = scmp.lt.s32.totalorder %s17, 1
      %s174 = scalar_select %p173, %s17, 1
      %p175 = scmp.lt.s32.totalorder %s18, 0
      %s176 = scalar_select %p175, %s18, 0
      %s177 = smul.addr %s174, 5
      %s178 = sadd.s32 %s176, %s177
      %s179 = smul.addr %s178, 4
      %s180 = scalar_lea.vmem %s2, %s179
      %v182 = vld [vmem:[%s168] sm:$0xf]
      %v183 = vld [vmem:[%s168 + $0x4] sm:$0xf]
      %v184 = vld [vmem:[%s168 + $0x8] sm:$0xf]
      %v185 = vld [vmem:[%s168 + $0xc] sm:$0xf]
      %v186 = vld [vmem:[%s168 + $0x10] sm:$0xf]
      %v187 = vld [vmem:[%s172] sm:$0xf]
      %s188 = scalar_lea.vmem %s172, 4
      %v189 = vld [vmem:[%s188] sm:$0xf]
      %v195 = vunpack.c.l.b16 %v182
      %v196 = vunpack.c.l.b16 %v183
      %v197 = vunpack.c.l.b16 %v184
      %v198 = vunpack.c.l.b16 %v185
      %v199 = vunpack.c.l.b16 %v186
      %v200 = vpack.c.b16 %v196, %v195
      %v201 = vpack.c.b16 %v198, %v197
      %v202 = vpack.c.b16 %v199, %v199
      %vm203 = vsmask.f32 7424
      %v205 = vshrl.u32 %v200, 16
      %v207 = vshll.u32 %v200, 16
      %v209 = vrot.slane %v207, 1
      %v210 = vor.u32 %v205, %v209
      %v212 = vshll.u32 %v201, 16
      %v214 = vrot.slane %v212, 1
      %v215 = vsel %vm203, %v210, %v214
      %v216 = vshrl.u32 %v201, 16
      %v218 = vor.u32 %v216, %v214
      %v220 = vshll.u32 %v202, 16
      %v222 = vrot.slane %v220, 1
      %v223 = vsel %vm203, %v218, %v222
      %v224 = vshrl.u32 %v202, 16
      %v226 = vor.u32 %v224, %v222
      %vm227 = vcmask 64512
      %v229 = vsel %vm227, %v215, 0
      %v232 = vsel %vm227, %v223, 0
      %v235 = vsel %vm227, %v226, 0
      %vm237 = vcmask 1043456
      %v239 = vsel %vm237, %v189, 0
      %241 = vmatprep.subr.bf16.mxu0 0
      %242 = vmatpush1.bf16.msra.mxu0 %v239
      %243 = vmatprep.subr.bf16.mxu0 0
      %244 = vmatpush1.bf16.msra.mxu0 0
      %245 = vmatprep.subr.bf16.mxu0 0
      %246 = vmatpush1.bf16.msra.mxu0 0
      %247 = vmatprep.subr.bf16.mxu0 0
      %248 = vmatpush1.bf16.msra.mxu0 0
      %249 = vmatprep.subr.bf16.mxu0 0
      %250 = vmatpush1.bf16.msra.mxu0 0
      %251 = vmatprep.subr.bf16.mxu0 0
      %252 = vmatpush1.bf16.msra.mxu0 0
      %253 = vmatprep.subr.bf16.mxu0 0
      %254 = vmatpush1.bf16.msra.mxu0 0
      %255 = vmatprep.subr.bf16.mxu0 0
      %256 = vmatpush1.bf16.msra.mxu0 0
      %257 = vmatprep.subr.bf16.mxu0 0
      %258 = vmatpush1.bf16.msra.mxu0 0
      %259 = vmatprep.subr.bf16.mxu0 0
      %260 = vmatpush1.bf16.msra.mxu0 0
      %261 = vmatprep.subr.bf16.mxu0 0
      %262 = vmatpush1.bf16.msra.mxu0 0
      %263 = vmatprep.subr.bf16.mxu0 0
      %264 = vmatpush1.bf16.msra.mxu0 0
      %265 = vmatprep.subr.bf16.mxu0 0
      %266 = vmatpush1.bf16.msra.mxu0 0
      %267 = vmatprep.subr.bf16.mxu0 0
      %268 = vmatpush1.bf16.msra.mxu0 0
      %269 = vmatprep.subr.bf16.mxu0 0
      %270 = vmatpush1.bf16.msra.mxu0 0
      %271 = vmatprep.subr.bf16.mxu0 0
      %272 = vmatpush1.bf16.msra.mxu0 0
      %273 = vmatprep.mubr.bf16.mxu0 0
      %274 = vmatmul.mubr.bf16.gmra.mrb[0].mxu0 %v229
      %v275 = vpop.f32.mrb[0].mxu0
      %v276 = vadd.f32 0.0, %v275
      %v277 = vpop.f32.mrb[0].mxu0
      %v278 = vpop.f32.mrb[0].mxu0
      %v279 = vadd.f32 0.0, %v278
      %v280 = vpop.f32.mrb[0].mxu0
      %281 = vmatprep.mubr.bf16.mxu0 0
      %282 = vmatmul.mubr.bf16.gmra.mrb[0].mxu0 %v232
      %v283 = vpop.f32.mrb[0].mxu0
      %v284 = vadd.f32 0.0, %v283
      %v285 = vpop.f32.mrb[0].mxu0
      %v286 = vpop.f32.mrb[0].mxu0
      %v287 = vadd.f32 0.0, %v286
      %v288 = vpop.f32.mrb[0].mxu0
      %289 = vmatprep.mubr.bf16.mxu0 0
      %290 = vmatmul.mubr.bf16.gmra.mrb[0].mxu0 %v235
      %v291 = vpop.f32.mrb[0].mxu0
      %v292 = vadd.f32 0.0, %v291
      %v293 = vpop.f32.mrb[0].mxu0
      %v294 = vpop.f32.mrb[0].mxu0
      %v295 = vpop.f32.mrb[0].mxu0
      %296 = vdwg.mxu0
      %v297 = vsel %vm227, %v200, 0
      %v299 = vsel %vm227, %v201, 0
      %v301 = vsel %vm227, %v202, 0
      %v304 = vsel %vm237, %v187, 0
      %306 = vmatprep.subr.bf16.mxu0 0
      %307 = vmatpush1.bf16.msra.mxu0 %v304
      %308 = vmatprep.subr.bf16.mxu0 0
      %309 = vmatpush1.bf16.msra.mxu0 0
      %310 = vmatprep.subr.bf16.mxu0 0
      %311 = vmatpush1.bf16.msra.mxu0 0
      %312 = vmatprep.subr.bf16.mxu0 0
      %313 = vmatpush1.bf16.msra.mxu0 0
      %314 = vmatprep.subr.bf16.mxu0 0
      %315 = vmatpush1.bf16.msra.mxu0 0
      %316 = vmatprep.subr.bf16.mxu0 0
      %317 = vmatpush1.bf16.msra.mxu0 0
      %318 = vmatprep.subr.bf16.mxu0 0
      %319 = vmatpush1.bf16.msra.mxu0 0
      %320 = vmatprep.subr.bf16.mxu0 0
      %321 = vmatpush1.bf16.msra.mxu0 0
      %322 = vmatprep.subr.bf16.mxu0 0
      %323 = vmatpush1.bf16.msra.mxu0 0
      %324 = vmatprep.subr.bf16.mxu0 0
      %325 = vmatpush1.bf16.msra.mxu0 0
      %326 = vmatprep.subr.bf16.mxu0 0
      %327 = vmatpush1.bf16.msra.mxu0 0
      %328 = vmatprep.subr.bf16.mxu0 0
      %329 = vmatpush1.bf16.msra.mxu0 0
      %330 = vmatprep.subr.bf16.mxu0 0
      %331 = vmatpush1.bf16.msra.mxu0 0
      %332 = vmatprep.subr.bf16.mxu0 0
      %333 = vmatpush1.bf16.msra.mxu0 0
      %334 = vmatprep.subr.bf16.mxu0 0
      %335 = vmatpush1.bf16.msra.mxu0 0
      %336 = vmatprep.subr.bf16.mxu0 0
      %337 = vmatpush1.bf16.msra.mxu0 0
      %338 = vmatprep.mubr.bf16.mxu0 0
      %339 = vmatmul.mubr.bf16.gmra.mrb[0].mxu0 %v297
      %v340 = vpop.f32.mrb[0].mxu0
      %v341 = vadd.f32 %v276, %v340
      %v342 = vpop.f32.mrb[0].mxu0
      %v343 = vpop.f32.mrb[0].mxu0
      %v344 = vadd.f32 %v279, %v343
      %v345 = vpop.f32.mrb[0].mxu0
      %346 = vmatprep.mubr.bf16.mxu0 0
      %347 = vmatmul.mubr.bf16.gmra.mrb[0].mxu0 %v299
      %v348 = vpop.f32.mrb[0].mxu0
      %v349 = vadd.f32 %v284, %v348
      %v350 = vpop.f32.mrb[0].mxu0
      %v351 = vpop.f32.mrb[0].mxu0
      %v352 = vadd.f32 %v287, %v351
      %v353 = vpop.f32.mrb[0].mxu0
      %354 = vmatprep.mubr.bf16.mxu0 0
      %355 = vmatmul.mubr.bf16.gmra.mrb[0].mxu0 %v301
      %v356 = vpop.f32.mrb[0].mxu0
      %v357 = vadd.f32 %v292, %v356
      %v358 = vpop.f32.mrb[0].mxu0
      %v359 = vpop.f32.mrb[0].mxu0
      %v360 = vpop.f32.mrb[0].mxu0
      %361 = vdwg.mxu0
      %v362 = vmul.f32 %v341, 0.5
      %v363 = vmul.f32 %v344, 0.5
      %v364 = vmul.f32 %v349, 0.5
      %v365 = vmul.f32 %v352, 0.5
      %v366 = vmul.f32 %v357, 0.5
      %v367 = vmul.f32 %v341, 0.044715
      %v368 = vmul.f32 %v344, 0.044715
      %v369 = vmul.f32 %v349, 0.044715
      %v370 = vmul.f32 %v352, 0.044715
      %v371 = vmul.f32 %v357, 0.044715
      %v372 = vmul.f32 %v367, %v341
      %v373 = vmul.f32 %v368, %v344
      %v374 = vmul.f32 %v369, %v349
      %v375 = vmul.f32 %v370, %v352
      %v376 = vmul.f32 %v371, %v357
      %v377 = vmul.f32 %v372, %v341
      %v378 = vmul.f32 %v373, %v344
      %v379 = vmul.f32 %v374, %v349
      %v380 = vmul.f32 %v375, %v352
      %v381 = vmul.f32 %v376, %v357
      %v382 = vadd.f32 %v341, %v377
      %v383 = vadd.f32 %v344, %v378
      %v384 = vadd.f32 %v349, %v379
      %v385 = vadd.f32 %v352, %v380
      %v386 = vadd.f32 %v357, %v381
      %v387 = vmul.f32 %v382, 0.7978846
      %v388 = vmul.f32 %v383, 0.7978846
      %v389 = vmul.f32 %v384, 0.7978846
      %v390 = vmul.f32 %v385, 0.7978846
      %v391 = vmul.f32 %v386, 0.7978846
      %v392 = vtanh.pop %v387
      %v393 = vtanh.pop %v388
      %v394 = vtanh.pop %v389
      %v395 = vtanh.pop %v390
      %v396 = vtanh.pop %v391
      %v397 = vadd.f32 %v392, 1.0
      %v398 = vadd.f32 %v393, 1.0
      %v399 = vadd.f32 %v394, 1.0
      %v400 = vadd.f32 %v395, 1.0
      %v401 = vadd.f32 %v396, 1.0
      %v402 = vmul.f32 %v362, %v397
      %v403 = vmul.f32 %v363, %v398
      %v404 = vmul.f32 %v364, %v399
      %v405 = vmul.f32 %v365, %v400
      %v406 = vmul.f32 %v366, %v401
      %v407 = vpack.c.bf16 %v403, %v402
      %v408 = vpack.c.bf16 %v405, %v404
      %v409 = vpack.c.bf16 %v406, %v406
      %v413 = vunpack.c.l.b16 %v407
      %v414 = vunpack.c.h.b16 %v407
      %v415 = vunpack.c.l.b16 %v408
      %v416 = vunpack.c.h.b16 %v408
      %v417 = vunpack.c.l.b16 %v409
      %v418 = vpack.c.b16 %v413, %v413
      %v419 = vpack.c.b16 %v414, %v414
      %v420 = vpack.c.b16 %v415, %v415
      %v421 = vpack.c.b16 %v416, %v416
      %v422 = vpack.c.b16 %v417, %v417
      %vm428 = vcmask 60416
      %429 = vst.msk [vmem:[%s180] sm:$0xf] %vm428, %v418
      %430 = vst.msk [vmem:[%s180 + $0x4] sm:$0xf] %vm428, %v419
      %431 = vst.msk [vmem:[%s180 + $0x8] sm:$0xf] %vm428, %v420
      %432 = vst.msk [vmem:[%s180 + $0xc] sm:$0xf] %vm428, %v421
      %vm433 = vcmask 60416
      %vm434 = vsmask.f32 3328
      %vm435 = vmand %vm433, %vm434
      %v436 = vld [vmem:[%s180 + $0x10] sm:$0xf]
      %v437 = vsel %vm435, %v422, %v436
      %438 = vst [vmem:[%s180 + $0x10] sm:$0xf] %v437
      %p439 = scmp.lt.s32.totalorder %s17, 1
      %s440 = scalar_select %p439, %s17, 1
      %p441 = scmp.lt.s32.totalorder %s18, 0
      %s442 = scalar_select %p441, %s18, 0
      %s443 = smul.addr %s440, 5
      %s444 = sadd.s32 %s442, %s443
      %s445 = smul.addr %s444, 4
      %s446 = scalar_lea.vmem %s2, %s445
      // Predicated region
      $region29: #{_lambda_.7} parent=27 // pred_check
        %p447 = pneg %p97
      $region30: #{_lambda_.7} parent=27 // pred_check_branch
        %449 = sbr.rel (%p447) target = $region32
      $region31: #{_lambda_.7} parent=27 // pred_region
        _
      $region32: #{_lambda_.7} parent=27 // pred_fallthru
        _
    $region28: #{_lambda_.7} parent=5 // pred_fallthru
      _
    %p450 = scmp.le.s32.totalorder 2, %s8
    // Predicated region
    $region33: #{_lambda_.7} parent=5 // pred_check
      %p451 = pneg %p450
    $region34: #{_lambda_.7} parent=5 // pred_check_branch
      %453 = sbr.rel (%p451) target = $region36
    $region35: #{_lambda_.7} parent=5 // pred_region
      %s454 = ssub.s32 %s8, 2
      // Predicated region
      $region37: #{_lambda_.7} parent=35 // pred_check
        %p455 = pneg %p103
      $region38: #{_lambda_.7} parent=35 // pred_check_branch
        %457 = sbr.rel (%p455) target = $region40
      $region39: #{_lambda_.7} parent=35 // pred_region
        %p458 = scmp.lt.s32.totalorder %s19, 1
        %s459 = scalar_select %p458, %s19, 1
        %p460 = scmp.lt.s32.totalorder %s20, 0
        %s461 = scalar_select %p460, %s20, 0
        %s462 = smul.addr %s459, 5
        %s463 = sadd.s32 %s461, %s462
        %s464 = smul.addr %s463, 4
        %s465 = scalar_lea.vmem %s2, %s464
      $region40: #{_lambda_.7} parent=35 // pred_fallthru
        _
    $region36: #{_lambda_.7} parent=5 // pred_fallthru
      _
  $region6: #{_lambda_.7} parent=0 // loop_footer
    %s12 = sadd.s32 1, %s8
  $region7: #{_lambda_.7} parent=0 // loop_footer_branch
    %7 = sbr.rel target = $region3
  $region8: #{_lambda_.7} parent=0 // loop_exit
    _

// kernel: _lambda_.6
$region0: #{_lambda_.6}
  #allocation0 [shape = 'u32[]', space=smem, size = 0x4, offset = 0x4, fixed_abs, tag = 'smem constant byte address 0x4 - core index']
  #allocation1 [shape = 'u32[144,128]{1,0:T(1,128)}', space=vmem, size = 0x12000, scoped, tag = 'internal scratch']
  %s0 = inlined_call_operand.vmem [shape: bf16[2,80,5], index: 0, kind: input, shape index: {}]
  %s1 = inlined_call_operand.vmem [shape: bf16[2,5,4], index: 1, kind: input, shape index: {}]
  %s2 = inlined_call_operand.vmem [shape: bf16[2,79,4], index: 2, kind: output, shape index: {}]
  %s3 = sld [smem:[#allocation0]]
  $region41: #{_lambda_.6} parent=0
    _
  %s5 = ssub.s32 1, %s3
  %s6 = scalar_select 0, %s5, %s3
  loop: start=0, step=1, limit=4
  $region2: #{_lambda_.6} parent=0 // loop_pre_header
    _
  $region3: #{_lambda_.6} parent=0 // loop_header
    %s8 = sphi 0, %s12
    %p9 = scmp.ge.s32.totalorder %s8, 4
    %s15 = sphi 0, %s27
    %s16 = sphi 0, %s23
    %s17 = sphi 0, %s15
    %s18 = sphi 0, %s16
    %s19 = sphi 0, %s17
    %s20 = sphi 0, %s18
    %s30 = sphi 0, %s32
    %s33 = sphi 0, %s30
    %s34 = sphi 0, %s33
    %s50 = sphi 0, %s34
    %s56 = sphi 0, %s58
    %s59 = sphi 0, %s56
    %s60 = sphi 0, %s59
    %s76 = sphi 0, %s60
    %s84 = sphi 0, %s86
    %s87 = sphi 0, %s84
    %s88 = sphi 0, %s87
    %s104 = sphi 0, %s88
  $region4: #{_lambda_.6} parent=0 // loop_header_branch
    %11 = sbr.rel (%p9) target = $region8
  $region5: #{_lambda_.6} parent=0 // loop_body
    %s13 = ssub.s32 %s8, 1
    %s14 = ssub.s32 %s8, 2
    %s21 = sadd.s32 1, %s16
    %p22 = scmp.ge.s32.totalorder %s21, 1
    %s23 = scalar_select %p22, 0, %s21
    %s24 = sadd.s32 1, %s15
    %s25 = scalar_select %p22, %s24, %s15
    %p26 = scmp.ge.s32.totalorder %s25, 2
    %s27 = scalar_select %p26, 0, %s25
    %s28 = ssub.s32 %s15, %s27
    %p29 = scmp.eq.s32.totalorder %s28, 0
    %s31 = sadd.s32 %s30, 1
    %s32 = scalar_select %p29, %s30, %s31
    %p35 = pneg %p29
    %p36 = scmp.eq.s32.totalorder %s8, 1
    %p37 = por %p35, %p36
    %p38 = scmp.ne.s32.totalorder %s30, %s33
    %p39 = scmp.eq.s32.totalorder %s8, 0
    %p40 = por %p38, %p39
    %p41 = scmp.ne.s32.totalorder %s30, %s33
    %p42 = scmp.eq.s32.totalorder %s13, 1
    %p43 = por %p41, %p42
    %p44 = scmp.ne.s32.totalorder %s33, %s34
    %p45 = scmp.eq.s32.totalorder %s13, 0
    %p46 = por %p44, %p45
    %p47 = scmp.ne.s32.totalorder %s33, %s34
    %p48 = scmp.eq.s32.totalorder %s14, 1
    %p49 = por %p47, %p48
    %p51 = scmp.ne.s32.totalorder %s34, %s50
    %p52 = scmp.eq.s32.totalorder %s14, 0
    %p53 = por %p51, %p52
    %s54 = ssub.s32 %s16, %s23
    %p55 = scmp.eq.s32.totalorder %s54, 0
    %s57 = sadd.s32 %s56, 1
    %s58 = scalar_select %p55, %s56, %s57
    %p61 = pneg %p55
    %p62 = scmp.eq.s32.totalorder %s8, 1
    %p63 = por %p61, %p62
    %p64 = scmp.ne.s32.totalorder %s56, %s59
    %p65 = scmp.eq.s32.totalorder %s8, 0
    %p66 = por %p64, %p65
    %p67 = scmp.ne.s32.totalorder %s56, %s59
    %p68 = scmp.eq.s32.totalorder %s13, 1
    %p69 = por %p67, %p68
    %p70 = scmp.ne.s32.totalorder %s59, %s60
    %p71 = scmp.eq.s32.totalorder %s13, 0
    %p72 = por %p70, %p71
    %p73 = scmp.ne.s32.totalorder %s59, %s60
    %p74 = scmp.eq.s32.totalorder %s14, 1
    %p75 = por %p73, %p74
    %p77 = scmp.ne.s32.totalorder %s60, %s76
    %p78 = scmp.eq.s32.totalorder %s14, 0
    %p79 = por %p77, %p78
    %s80 = ssub.s32 %s15, %s27
    %s81 = ssub.s32 %s16, %s23
    %s82 = sor.u32 %s80, %s81
    %p83 = scmp.eq.s32.totalorder %s82, 0
    %s85 = sadd.s32 %s84, 1
    %s86 = scalar_select %p83, %s84, %s85
    %p89 = pneg %p83
    %p90 = scmp.eq.s32.totalorder %s8, 1
    %p91 = por %p89, %p90
    %p92 = scmp.ne.s32.totalorder %s84, %s87
    %p93 = scmp.eq.s32.totalorder %s8, 0
    %p94 = por %p92, %p93
    %p95 = scmp.ne.s32.totalorder %s84, %s87
    %p96 = scmp.eq.s32.totalorder %s13, 1
    %p97 = por %p95, %p96
    %p98 = scmp.ne.s32.totalorder %s87, %s88
    %p99 = scmp.eq.s32.totalorder %s13, 0
    %p100 = por %p98, %p99
    %p101 = scmp.ne.s32.totalorder %s87, %s88
    %p102 = scmp.eq.s32.totalorder %s14, 1
    %p103 = por %p101, %p102
    %p105 = scmp.ne.s32.totalorder %s88, %s104
    %p106 = scmp.eq.s32.totalorder %s14, 0
    %p107 = por %p105, %p106
    %p108 = scmp.le.s32.totalorder 1, %s8
    %p109 = scmp.lt.s32.totalorder %s8, 3
    %p110 = pnand %p108, %p109
    %p111 = pneg %p110
    // Predicated region
    $region9: #{_lambda_.6} parent=5 // pred_check
      _
    $region10: #{_lambda_.6} parent=5 // pred_check_branch
      %113 = sbr.rel (%p110) target = $region12
    $region11: #{_lambda_.6} parent=5 // pred_region
      %s114 = ssub.s32 %s8, 1
      // Predicated region
      $region13: #{_lambda_.6} parent=11 // pred_check
        %p115 = pneg %p72
      $region14: #{_lambda_.6} parent=11 // pred_check_branch
        %117 = sbr.rel (%p115) target = $region16
      $region15: #{_lambda_.6} parent=11 // pred_region
        %p118 = scmp.lt.s32.totalorder %s18, 0
        %s119 = scalar_select %p118, %s18, 0
        %s120 = smul.addr %s119, 4
        %s121 = scalar_lea.vmem %s1, %s120
      $region16: #{_lambda_.6} parent=11 // pred_fallthru
        _
    $region12: #{_lambda_.6} parent=5 // pred_fallthru
      _
    %p122 = scmp.lt.s32.totalorder %s8, 2
    // Predicated region
    $region17: #{_lambda_.6} parent=5 // pred_check
      %p123 = pneg %p122
    $region18: #{_lambda_.6} parent=5 // pred_check_branch
      %125 = sbr.rel (%p123) target = $region20
    $region19: #{_lambda_.6} parent=5 // pred_region
      // Predicated region
      $region21: #{_lambda_.6} parent=19 // pred_check
        %p126 = pneg %p40
      $region22: #{_lambda_.6} parent=19 // pred_check_branch
        %128 = sbr.rel (%p126) target = $region24
      $region23: #{_lambda_.6} parent=19 // pred_region
        %p129 = scmp.lt.s32.totalorder %s15, 1
        %s130 = scalar_select %p129, %s15, 1
        %s131 = smul.addr %s130, 10
        %s132 = smul.addr %s131, 4
        %s133 = scalar_lea.vmem %s0, %s132
      $region24: #{_lambda_.6} parent=19 // pred_fallthru
        _
    $region20: #{_lambda_.6} parent=5 // pred_fallthru
      _
    %p134 = scmp.le.s32.totalorder 1, %s8
    %p135 = scmp.lt.s32.totalorder %s8, 3
    %p136 = pnand %p134, %p135
    %p137 = pneg %p136
    // Predicated region
    $region25: #{_lambda_.6} parent=5 // pred_check
      _
    $region26: #{_lambda_.6} parent=5 // pred_check_branch
      %139 = sbr.rel (%p136) target = $region28
    $region27: #{_lambda_.6} parent=5 // pred_region
      %s140 = ssub.s32 %s8, 1
      %p141 = scmp.lt.s32.totalorder %s17, 1
      %s142 = scalar_select %p141, %s17, 1
      %s143 = smul.addr %s142, 10
      %s144 = smul.addr %s143, 4
      %s145 = scalar_lea.vmem %s0, %s144
      %p146 = pneg %p46
      %p147 = pneg %p43
      %p148 = scmp.lt.s32.totalorder %s18, 0
      %s149 = scalar_select %p148, %s18, 0
      %s150 = smul.addr %s149, 4
      %s151 = scalar_lea.vmem %s1, %s150
      %p152 = pneg %p72
      %p153 = pneg %p69
      %p154 = pneg %p100
      %p155 = pneg %p97
      %p156 = scmp.lt.s32.totalorder %s17, 1
      %s157 = scalar_select %p156, %s17, 1
      %p158 = scmp.lt.s32.totalorder %s18, 0
      %s159 = scalar_select %p158, %s18, 0
      %s160 = smul.addr %s157, 10
      %s161 = sadd.s32 %s159, %s160
      %s162 = smul.addr %s161, 4
      %s163 = scalar_lea.vmem %s2, %s162
      %p164 = scmp.lt.s32.totalorder %s17, 1
      %s165 = scalar_select %p164, %s17, 1
      %s166 = smul.addr %s165, 10
      %s167 = smul.addr %s166, 4
      %s168 = scalar_lea.vmem %s0, %s167
      %p169 = scmp.lt.s32.totalorder %s18, 0
      %s170 = scalar_select %p169, %s18, 0
      %s171 = smul.addr %s170, 4
      %s172 = scalar_lea.vmem %s1, %s171
      %p173 = scmp.lt.s32.totalorder %s17, 1
      %s174 = scalar_select %p173, %s17, 1
      %p175 = scmp.lt.s32.totalorder %s18, 0
      %s176 = scalar_select %p175, %s18, 0
      %s177 = smul.addr %s174, 10
      %s178 = sadd.s32 %s176, %s177
      %s179 = smul.addr %s178, 4
      %s180 = scalar_lea.vmem %s2, %s179
      %v182 = vld [vmem:[%s168] sm:$0xf]
      %v183 = vld [vmem:[%s168 + $0x4] sm:$0xf]
      %v184 = vld [vmem:[%s168 + $0x8] sm:$0xf]
      %v185 = vld [vmem:[%s168 + $0xc] sm:$0xf]
      %v186 = vld [vmem:[%s168 + $0x10] sm:$0xf]
      %v187 = vld [vmem:[%s168 + $0x14] sm:$0xf]
      %v188 = vld [vmem:[%s168 + $0x18] sm:$0xf]
      %v189 = vld [vmem:[%s168 + $0x1c] sm:$0xf]
      %v190 = vld [vmem:[%s168 + $0x20] sm:$0xf]
      %v191 = vld [vmem:[%s168 + $0x24] sm:$0xf]
      %v192 = vld [vmem:[%s172] sm:$0x7]
      %s193 = scalar_lea.vmem %s172, 4
      %v194 = vld [vmem:[%s193] sm:$0x7]
      %v205 = vunpack.c.l.b16 %v182
      %v206 = vunpack.c.l.b16 %v183
      %v207 = vunpack.c.l.b16 %v184
      %v208 = vunpack.c.l.b16 %v185
      %v209 = vunpack.c.l.b16 %v186
      %v210 = vunpack.c.l.b16 %v187
      %v211 = vunpack.c.l.b16 %v188
      %v212 = vunpack.c.l.b16 %v189
      %v213 = vunpack.c.l.b16 %v190
      %v214 = vunpack.c.l.b16 %v191
      %v215 = vpack.c.b16 %v206, %v205
      %v216 = vpack.c.b16 %v208, %v207
      %v217 = vpack.c.b16 %v210, %v209
      %v218 = vpack.c.b16 %v212, %v211
      %v219 = vpack.c.b16 %v214, %v213
      %vm220 = vsmask.f32 7424
      %v222 = vshrl.u32 %v215, 16
      %v224 = vshll.u32 %v215, 16
      %v226 = vrot.slane %v224, 1
      %v227 = vor.u32 %v222, %v226
      %v229 = vshll.u32 %v216, 16
      %v231 = vrot.slane %v229, 1
      %v232 = vsel %vm220, %v227, %v231
      %v233 = vshrl.u32 %v216, 16
      %v235 = vor.u32 %v233, %v231
      %v237 = vshll.u32 %v217, 16
      %v239 = vrot.slane %v237, 1
      %v240 = vsel %vm220, %v235, %v239
      %v241 = vshrl.u32 %v217, 16
      %v243 = vor.u32 %v241, %v239
      %v245 = vshll.u32 %v218, 16
      %v247 = vrot.slane %v245, 1
      %v248 = vsel %vm220, %v243, %v247
      %v249 = vshrl.u32 %v218, 16
      %v251 = vor.u32 %v249, %v247
      %v253 = vshll.u32 %v219, 16
      %v255 = vrot.slane %v253, 1
      %v256 = vsel %vm220, %v251, %v255
      %v257 = vshrl.u32 %v219, 16
      %v259 = vor.u32 %v257, %v255
      %vm260 = vcmask 39936
      %v262 = vsel %vm260, %v232, 0
      %v265 = vsel %vm260, %v240, 0
      %v268 = vsel %vm260, %v248, 0
      %v271 = vsel %vm260, %v256, 0
      %v274 = vsel %vm260, %v259, 0
      %vm276 = vcmask 1041408
      %vm277 = vcmask 1042432
      %v278 = vsel %vm276, 4294967295, 65535
      %v279 = vsel %vm277, %v278, 0
      %v281 = vand.u32 %v194, %v279
      %283 = vmatprep.subr.bf16.mxu0 0
      %284 = vmatpush1.bf16.msra.mxu0 %v281
      %285 = vmatprep.subr.bf16.mxu0 0
      %286 = vmatpush1.bf16.msra.mxu0 0
      %287 = vmatprep.subr.bf16.mxu0 0
      %288 = vmatpush1.bf16.msra.mxu0 0
      %289 = vmatprep.subr.bf16.mxu0 0
      %290 = vmatpush1.bf16.msra.mxu0 0
      %291 = vmatprep.subr.bf16.mxu0 0
      %292 = vmatpush1.bf16.msra.mxu0 0
      %293 = vmatprep.subr.bf16.mxu0 0
      %294 = vmatpush1.bf16.msra.mxu0 0
      %295 = vmatprep.subr.bf16.mxu0 0
      %296 = vmatpush1.bf16.msra.mxu0 0
      %297 = vmatprep.subr.bf16.mxu0 0
      %298 = vmatpush1.bf16.msra.mxu0 0
      %299 = vmatprep.subr.bf16.mxu0 0
      %300 = vmatpush1.bf16.msra.mxu0 0
      %301 = vmatprep.subr.bf16.mxu0 0
      %302 = vmatpush1.bf16.msra.mxu0 0
      %303 = vmatprep.subr.bf16.mxu0 0
      %304 = vmatpush1.bf16.msra.mxu0 0
      %305 = vmatprep.subr.bf16.mxu0 0
      %306 = vmatpush1.bf16.msra.mxu0 0
      %307 = vmatprep.subr.bf16.mxu0 0
      %308 = vmatpush1.bf16.msra.mxu0 0
      %309 = vmatprep.subr.bf16.mxu0 0
      %310 = vmatpush1.bf16.msra.mxu0 0
      %311 = vmatprep.subr.bf16.mxu0 0
      %312 = vmatpush1.bf16.msra.mxu0 0
      %313 = vmatprep.subr.bf16.mxu0 0
      %314 = vmatpush1.bf16.msra.mxu0 0
      %315 = vmatprep.mubr.bf16.mxu0 0
      %316 = vmatmul.mubr.bf16.gmra.mrb[0].mxu0 %v262
      %v317 = vpop.f32.mrb[0].mxu0
      %v318 = vadd.f32 0.0, %v317
      %v319 = vpop.f32.mrb[0].mxu0
      %v320 = vpop.f32.mrb[0].mxu0
      %v321 = vadd.f32 0.0, %v320
      %v322 = vpop.f32.mrb[0].mxu0
      %323 = vmatprep.mubr.bf16.mxu0 0
      %324 = vmatmul.mubr.bf16.gmra.mrb[0].mxu0 %v265
      %v325 = vpop.f32.mrb[0].mxu0
      %v326 = vadd.f32 0.0, %v325
      %v327 = vpop.f32.mrb[0].mxu0
      %v328 = vpop.f32.mrb[0].mxu0
      %v329 = vadd.f32 0.0, %v328
      %v330 = vpop.f32.mrb[0].mxu0
      %331 = vmatprep.mubr.bf16.mxu0 0
      %332 = vmatmul.mubr.bf16.gmra.mrb[0].mxu0 %v268
      %v333 = vpop.f32.mrb[0].mxu0
      %v334 = vadd.f32 0.0, %v333
      %v335 = vpop.f32.mrb[0].mxu0
      %v336 = vpop.f32.mrb[0].mxu0
      %v337 = vadd.f32 0.0, %v336
      %v338 = vpop.f32.mrb[0].mxu0
      %339 = vmatprep.mubr.bf16.mxu0 0
      %340 = vmatmul.mubr.bf16.gmra.mrb[0].mxu0 %v271
      %v341 = vpop.f32.mrb[0].mxu0
      %v342 = vadd.f32 0.0, %v341
      %v343 = vpop.f32.mrb[0].mxu0
      %v344 = vpop.f32.mrb[0].mxu0
      %v345 = vadd.f32 0.0, %v344
      %v346 = vpop.f32.mrb[0].mxu0
      %347 = vmatprep.mubr.bf16.mxu0 0
      %348 = vmatmul.mubr.bf16.gmra.mrb[0].mxu0 %v274
      %v349 = vpop.f32.mrb[0].mxu0
      %v350 = vadd.f32 0.0, %v349
      %v351 = vpop.f32.mrb[0].mxu0
      %v352 = vpop.f32.mrb[0].mxu0
      %v353 = vadd.f32 0.0, %v352
      %v354 = vpop.f32.mrb[0].mxu0
      %355 = vdwg.mxu0
      %v356 = vsel %vm260, %v215, 0
      %v358 = vsel %vm260, %v216, 0
      %v360 = vsel %vm260, %v217, 0
      %v362 = vsel %vm260, %v218, 0
      %v364 = vsel %vm260, %v219, 0
      %v367 = vand.u32 %v192, %v279
      %369 = vmatprep.subr.bf16.mxu0 0
      %370 = vmatpush1.bf16.msra.mxu0 %v367
      %371 = vmatprep.subr.bf16.mxu0 0
      %372 = vmatpush1.bf16.msra.mxu0 0
      %373 = vmatprep.subr.bf16.mxu0 0
      %374 = vmatpush1.bf16.msra.mxu0 0
      %375 = vmatprep.subr.bf16.mxu0 0
      %376 = vmatpush1.bf16.msra.mxu0 0
      %377 = vmatprep.subr.bf16.mxu0 0
      %378 = vmatpush1.bf16.msra.mxu0 0
      %379 = vmatprep.subr.bf16.mxu0 0
      %380 = vmatpush1.bf16.msra.mxu0 0
      %381 = vmatprep.subr.bf16.mxu0 0
      %382 = vmatpush1.bf16.msra.mxu0 0
      %383 = vmatprep.subr.bf16.mxu0 0
      %384 = vmatpush1.bf16.msra.mxu0 0
      %385 = vmatprep.subr.bf16.mxu0 0
      %386 = vmatpush1.bf16.msra.mxu0 0
      %387 = vmatprep.subr.bf16.mxu0 0
      %388 = vmatpush1.bf16.msra.mxu0 0
      %389 = vmatprep.subr.bf16.mxu0 0
      %390 = vmatpush1.bf16.msra.mxu0 0
      %391 = vmatprep.subr.bf16.mxu0 0
      %392 = vmatpush1.bf16.msra.mxu0 0
      %393 = vmatprep.subr.bf16.mxu0 0
      %394 = vmatpush1.bf16.msra.mxu0 0
      %395 = vmatprep.subr.bf16.mxu0 0
      %396 = vmatpush1.bf16.msra.mxu0 0
      %397 = vmatprep.subr.bf16.mxu0 0
      %398 = vmatpush1.bf16.msra.mxu0 0
      %399 = vmatprep.subr.bf16.mxu0 0
      %400 = vmatpush1.bf16.msra.mxu0 0
      %401 = vmatprep.mubr.bf16.mxu0 0
      %402 = vmatmul.mubr.bf16.gmra.mrb[0].mxu0 %v356
      %v403 = vpop.f32.mrb[0].mxu0
      %v404 = vadd.f32 %v318, %v403
      %v405 = vpop.f32.mrb[0].mxu0
      %v406 = vpop.f32.mrb[0].mxu0
      %v407 = vadd.f32 %v321, %v406
      %v408 = vpop.f32.mrb[0].mxu0
      %409 = vmatprep.mubr.bf16.mxu0 0
      %410 = vmatmul.mubr.bf16.gmra.mrb[0].mxu0 %v358
      %v411 = vpop.f32.mrb[0].mxu0
      %v412 = vadd.f32 %v326, %v411
      %v413 = vpop.f32.mrb[0].mxu0
      %v414 = vpop.f32.mrb[0].mxu0
      %v415 = vadd.f32 %v329, %v414
      %v416 = vpop.f32.mrb[0].mxu0
      %417 = vmatprep.mubr.bf16.mxu0 0
      %418 = vmatmul.mubr.bf16.gmra.mrb[0].mxu0 %v360
      %v419 = vpop.f32.mrb[0].mxu0
      %v420 = vadd.f32 %v334, %v419
      %v421 = vpop.f32.mrb[0].mxu0
      %v422 = vpop.f32.mrb[0].mxu0
      %v423 = vadd.f32 %v337, %v422
      %v424 = vpop.f32.mrb[0].mxu0
      %425 = vmatprep.mubr.bf16.mxu0 0
      %426 = vmatmul.mubr.bf16.gmra.mrb[0].mxu0 %v362
      %v427 = vpop.f32.mrb[0].mxu0
      %v428 = vadd.f32 %v342, %v427
      %v429 = vpop.f32.mrb[0].mxu0
      %v430 = vpop.f32.mrb[0].mxu0
      %v431 = vadd.f32 %v345, %v430
      %v432 = vpop.f32.mrb[0].mxu0
      %433 = vmatprep.mubr.bf16.mxu0 0
      %434 = vmatmul.mubr.bf16.gmra.mrb[0].mxu0 %v364
      %v435 = vpop.f32.mrb[0].mxu0
      %v436 = vadd.f32 %v350, %v435
      %v437 = vpop.f32.mrb[0].mxu0
      %v438 = vpop.f32.mrb[0].mxu0
      %v439 = vadd.f32 %v353, %v438
      %v440 = vpop.f32.mrb[0].mxu0
      %441 = vdwg.mxu0
      %v442 = vmul.f32 %v404, 0.5
      %v443 = vmul.f32 %v407, 0.5
      %v444 = vmul.f32 %v412, 0.5
      %v445 = vmul.f32 %v415, 0.5
      %v446 = vmul.f32 %v420, 0.5
      %v447 = vmul.f32 %v423, 0.5
      %v448 = vmul.f32 %v428, 0.5
      %v449 = vmul.f32 %v431, 0.5
      %v450 = vmul.f32 %v436, 0.5
      %v451 = vmul.f32 %v439, 0.5
      %v452 = vmul.f32 %v404, 0.044715
      %v453 = vmul.f32 %v407, 0.044715
      %v454 = vmul.f32 %v412, 0.044715
      %v455 = vmul.f32 %v415, 0.044715
      %v456 = vmul.f32 %v420, 0.044715
      %v457 = vmul.f32 %v423, 0.044715
      %v458 = vmul.f32 %v428, 0.044715
      %v459 = vmul.f32 %v431, 0.044715
      %v460 = vmul.f32 %v436, 0.044715
      %v461 = vmul.f32 %v439, 0.044715
      %v462 = vmul.f32 %v452, %v404
      %v463 = vmul.f32 %v453, %v407
      %v464 = vmul.f32 %v454, %v412
      %v465 = vmul.f32 %v455, %v415
      %v466 = vmul.f32 %v456, %v420
      %v467 = vmul.f32 %v457, %v423
      %v468 = vmul.f32 %v458, %v428
      %v469 = vmul.f32 %v459, %v431
      %v470 = vmul.f32 %v460, %v436
      %v471 = vmul.f32 %v461, %v439
      %v472 = vmul.f32 %v462, %v404
      %v473 = vmul.f32 %v463, %v407
      %v474 = vmul.f32 %v464, %v412
      %v475 = vmul.f32 %v465, %v415
      %v476 = vmul.f32 %v466, %v420
      %v477 = vmul.f32 %v467, %v423
      %v478 = vmul.f32 %v468, %v428
      %v479 = vmul.f32 %v469, %v431
      %v480 = vmul.f32 %v470, %v436
      %v481 = vmul.f32 %v471, %v439
      %v482 = vadd.f32 %v404, %v472
      %v483 = vadd.f32 %v407, %v473
      %v484 = vadd.f32 %v412, %v474
      %v485 = vadd.f32 %v415, %v475
      %v486 = vadd.f32 %v420, %v476
      %v487 = vadd.f32 %v423, %v477
      %v488 = vadd.f32 %v428, %v478
      %v489 = vadd.f32 %v431, %v479
      %v490 = vadd.f32 %v436, %v480
      %v491 = vadd.f32 %v439, %v481
      %v492 = vmul.f32 %v482, 0.7978846
      %v493 = vmul.f32 %v483, 0.7978846
      %v494 = vmul.f32 %v484, 0.7978846
      %v495 = vmul.f32 %v485, 0.7978846
      %v496 = vmul.f32 %v486, 0.7978846
      %v497 = vmul.f32 %v487, 0.7978846
      %v498 = vmul.f32 %v488, 0.7978846
      %v499 = vmul.f32 %v489, 0.7978846
      %v500 = vmul.f32 %v490, 0.7978846
      %v501 = vmul.f32 %v491, 0.7978846
      %v502 = vtanh.pop %v492
      %v503 = vtanh.pop %v493
      %v504 = vtanh.pop %v494
      %v505 = vtanh.pop %v495
      %v506 = vtanh.pop %v496
      %v507 = vtanh.pop %v497
      %v508 = vtanh.pop %v498
      %v509 = vtanh.pop %v499
      %v510 = vtanh.pop %v500
      %v511 = vtanh.pop %v501
      %v512 = vadd.f32 %v502, 1.0
      %v513 = vadd.f32 %v503, 1.0
      %v514 = vadd.f32 %v504, 1.0
      %v515 = vadd.f32 %v505, 1.0
      %v516 = vadd.f32 %v506, 1.0
      %v517 = vadd.f32 %v507, 1.0
      %v518 = vadd.f32 %v508, 1.0
      %v519 = vadd.f32 %v509, 1.0
      %v520 = vadd.f32 %v510, 1.0
      %v521 = vadd.f32 %v511, 1.0
      %v522 = vmul.f32 %v442, %v512
      %v523 = vmul.f32 %v443, %v513
      %v524 = vmul.f32 %v444, %v514
      %v525 = vmul.f32 %v445, %v515
      %v526 = vmul.f32 %v446, %v516
      %v527 = vmul.f32 %v447, %v517
      %v528 = vmul.f32 %v448, %v518
      %v529 = vmul.f32 %v449, %v519
      %v530 = vmul.f32 %v450, %v520
      %v531 = vmul.f32 %v451, %v521
      %v532 = vpack.c.bf16 %v523, %v522
      %v533 = vpack.c.bf16 %v525, %v524
      %v534 = vpack.c.bf16 %v527, %v526
      %v535 = vpack.c.bf16 %v529, %v528
      %v536 = vpack.c.bf16 %v531, %v530
      %v542 = vunpack.c.l.b16 %v532
      %v543 = vunpack.c.h.b16 %v532
      %v544 = vunpack.c.l.b16 %v533
      %v545 = vunpack.c.h.b16 %v533
      %v546 = vunpack.c.l.b16 %v534
      %v547 = vunpack.c.h.b16 %v534
      %v548 = vunpack.c.l.b16 %v535
      %v549 = vunpack.c.h.b16 %v535
      %v550 = vunpack.c.l.b16 %v536
      %v551 = vunpack.c.h.b16 %v536
      %v552 = vpack.c.b16 %v542, %v542
      %v553 = vpack.c.b16 %v543, %v543
      %v554 = vpack.c.b16 %v544, %v544
      %v555 = vpack.c.b16 %v545, %v545
      %v556 = vpack.c.b16 %v546, %v546
      %v557 = vpack.c.b16 %v547, %v547
      %v558 = vpack.c.b16 %v548, %v548
      %v559 = vpack.c.b16 %v549, %v549
      %v560 = vpack.c.b16 %v550, %v550
      %v561 = vpack.c.b16 %v551, %v551
      %vm572 = vcmask 27648
      %573 = vst.msk [vmem:[%s180] sm:$0xf] %vm572, %v552
      %574 = vst.msk [vmem:[%s180 + $0x4] sm:$0xf] %vm572, %v553
      %575 = vst.msk [vmem:[%s180 + $0x8] sm:$0xf] %vm572, %v554
      %576 = vst.msk [vmem:[%s180 + $0xc] sm:$0xf] %vm572, %v555
      %577 = vst.msk [vmem:[%s180 + $0x10] sm:$0xf] %vm572, %v556
      %578 = vst.msk [vmem:[%s180 + $0x14] sm:$0xf] %vm572, %v557
      %579 = vst.msk [vmem:[%s180 + $0x18] sm:$0xf] %vm572, %v558
      %580 = vst.msk [vmem:[%s180 + $0x1c] sm:$0xf] %vm572, %v559
      %581 = vst.msk [vmem:[%s180 + $0x20] sm:$0xf] %vm572, %v560
      %vm582 = vcmask 27648
      %vm583 = vsmask.f32 3328
      %vm584 = vmand %vm582, %vm583
      %v585 = vld [vmem:[%s180 + $0x24] sm:$0xf]
      %v586 = vsel %vm584, %v561, %v585
      %587 = vst [vmem:[%s180 + $0x24] sm:$0xf] %v586
      %p588 = scmp.lt.s32.totalorder %s17, 1
      %s589 = scalar_select %p588, %s17, 1
      %p590 = scmp.lt.s32.totalorder %s18, 0
      %s591 = scalar_select %p590, %s18, 0
      %s592 = smul.addr %s589, 10
      %s593 = sadd.s32 %s591, %s592
      %s594 = smul.addr %s593, 4
      %s595 = scalar_lea.vmem %s2, %s594
      // Predicated region
      $region29: #{_lambda_.6} parent=27 // pred_check
        %p596 = pneg %p97
      $region30: #{_lambda_.6} parent=27 // pred_check_branch
        %598 = sbr.rel (%p596) target = $region32
      $region31: #{_lambda_.6} parent=27 // pred_region
        _
      $region32: #{_lambda_.6} parent=27 // pred_fallthru
        _
    $region28: #{_lambda_.6} parent=5 // pred_fallthru
      _
    %p599 = scmp.le.s32.totalorder 2, %s8
    // Predicated region
    $region33: #{_lambda_.6} parent=5 // pred_check
      %p600 = pneg %p599
    $region34: #{_lambda_.6} parent=5 // pred_check_branch
      %602 = sbr.rel (%p600) target = $region36
    $region35: #{_lambda_.6} parent=5 // pred_region
      %s603 = ssub.s32 %s8, 2
      // Predicated region
      $region37: #{_lambda_.6} parent=35 // pred_check
        %p604 = pneg %p103
      $region38: #{_lambda_.6} parent=35 // pred_check_branch
        %606 = sbr.rel (%p604) target = $region40
      $region39: #{_lambda_.6} parent=35 // pred_region
        %p607 = scmp.lt.s32.totalorder %s19, 1
        %s608 = scalar_select %p607, %s19, 1
        %p609 = scmp.lt.s32.totalorder %s20, 0
        %s610 = scalar_select %p609, %s20, 0
        %s611 = smul.addr %s608, 10
        %s612 = sadd.s32 %s610, %s611
        %s613 = smul.addr %s612, 4
        %s614 = scalar_lea.vmem %s2, %s613
      $region40: #{_lambda_.6} parent=35 // pred_fallthru
        _
    $region36: #{_lambda_.6} parent=5 // pred_fallthru
      _
  $region6: #{_lambda_.6} parent=0 // loop_footer
    %s12 = sadd.s32 1, %s8
  $region7: #{_lambda_.6} parent=0 // loop_footer_branch
    %7 = sbr.rel target = $region3
  $region8: #{_lambda_.6} parent=0 // loop_exit
    _

// kernel: _lambda_.8
$region0: #{_lambda_.8}
  #allocation0 [shape = 'u32[]', space=smem, size = 0x4, offset = 0x4, fixed_abs, tag = 'smem constant byte address 0x4 - core index']
  #allocation1 [shape = 'u32[144,128]{1,0:T(1,128)}', space=vmem, size = 0x12000, scoped, tag = 'internal scratch']
  %s0 = inlined_call_operand.vmem [shape: bf16[2,20,16], index: 0, kind: input, shape index: {}]
  %s1 = inlined_call_operand.vmem [shape: bf16[2,16,16], index: 1, kind: input, shape index: {}]
  %s2 = inlined_call_operand.vmem [shape: bf16[2,19,16], index: 2, kind: output, shape index: {}]
  %s3 = sld [smem:[#allocation0]]
  $region41: #{_lambda_.8} parent=0
    _
  %s5 = ssub.s32 1, %s3
  %s6 = scalar_select 0, %s5, %s3
  loop: start=0, step=1, limit=4
  $region2: #{_lambda_.8} parent=0 // loop_pre_header
    _
  $region3: #{_lambda_.8} parent=0 // loop_header
    %s8 = sphi 0, %s12
    %p9 = scmp.ge.s32.totalorder %s8, 4
    %s15 = sphi 0, %s27
    %s16 = sphi 0, %s23
    %s17 = sphi 0, %s15
    %s18 = sphi 0, %s16
    %s19 = sphi 0, %s17
    %s20 = sphi 0, %s18
    %s30 = sphi 0, %s32
    %s33 = sphi 0, %s30
    %s34 = sphi 0, %s33
    %s50 = sphi 0, %s34
    %s56 = sphi 0, %s58
    %s59 = sphi 0, %s56
    %s60 = sphi 0, %s59
    %s76 = sphi 0, %s60
    %s84 = sphi 0, %s86
    %s87 = sphi 0, %s84
    %s88 = sphi 0, %s87
    %s104 = sphi 0, %s88
  $region4: #{_lambda_.8} parent=0 // loop_header_branch
    %11 = sbr.rel (%p9) target = $region8
  $region5: #{_lambda_.8} parent=0 // loop_body
    %s13 = ssub.s32 %s8, 1
    %s14 = ssub.s32 %s8, 2
    %s21 = sadd.s32 1, %s16
    %p22 = scmp.ge.s32.totalorder %s21, 1
    %s23 = scalar_select %p22, 0, %s21
    %s24 = sadd.s32 1, %s15
    %s25 = scalar_select %p22, %s24, %s15
    %p26 = scmp.ge.s32.totalorder %s25, 2
    %s27 = scalar_select %p26, 0, %s25
    %s28 = ssub.s32 %s15, %s27
    %p29 = scmp.eq.s32.totalorder %s28, 0
    %s31 = sadd.s32 %s30, 1
    %s32 = scalar_select %p29, %s30, %s31
    %p35 = pneg %p29
    %p36 = scmp.eq.s32.totalorder %s8, 1
    %p37 = por %p35, %p36
    %p38 = scmp.ne.s32.totalorder %s30, %s33
    %p39 = scmp.eq.s32.totalorder %s8, 0
    %p40 = por %p38, %p39
    %p41 = scmp.ne.s32.totalorder %s30, %s33
    %p42 = scmp.eq.s32.totalorder %s13, 1
    %p43 = por %p41, %p42
    %p44 = scmp.ne.s32.totalorder %s33, %s34
    %p45 = scmp.eq.s32.totalorder %s13, 0
    %p46 = por %p44, %p45
    %p47 = scmp.ne.s32.totalorder %s33, %s34
    %p48 = scmp.eq.s32.totalorder %s14, 1
    %p49 = por %p47, %p48
    %p51 = scmp.ne.s32.totalorder %s34, %s50
    %p52 = scmp.eq.s32.totalorder %s14, 0
    %p53 = por %p51, %p52
    %s54 = ssub.s32 %s16, %s23
    %p55 = scmp.eq.s32.totalorder %s54, 0
    %s57 = sadd.s32 %s56, 1
    %s58 = scalar_select %p55, %s56, %s57
    %p61 = pneg %p55
    %p62 = scmp.eq.s32.totalorder %s8, 1
    %p63 = por %p61, %p62
    %p64 = scmp.ne.s32.totalorder %s56, %s59
    %p65 = scmp.eq.s32.totalorder %s8, 0
    %p66 = por %p64, %p65
    %p67 = scmp.ne.s32.totalorder %s56, %s59
    %p68 = scmp.eq.s32.totalorder %s13, 1
    %p69 = por %p67, %p68
    %p70 = scmp.ne.s32.totalorder %s59, %s60
    %p71 = scmp.eq.s32.totalorder %s13, 0
    %p72 = por %p70, %p71
    %p73 = scmp.ne.s32.totalorder %s59, %s60
    %p74 = scmp.eq.s32.totalorder %s14, 1
    %p75 = por %p73, %p74
    %p77 = scmp.ne.s32.totalorder %s60, %s76
    %p78 = scmp.eq.s32.totalorder %s14, 0
    %p79 = por %p77, %p78
    %s80 = ssub.s32 %s15, %s27
    %s81 = ssub.s32 %s16, %s23
    %s82 = sor.u32 %s80, %s81
    %p83 = scmp.eq.s32.totalorder %s82, 0
    %s85 = sadd.s32 %s84, 1
    %s86 = scalar_select %p83, %s84, %s85
    %p89 = pneg %p83
    %p90 = scmp.eq.s32.totalorder %s8, 1
    %p91 = por %p89, %p90
    %p92 = scmp.ne.s32.totalorder %s84, %s87
    %p93 = scmp.eq.s32.totalorder %s8, 0
    %p94 = por %p92, %p93
    %p95 = scmp.ne.s32.totalorder %s84, %s87
    %p96 = scmp.eq.s32.totalorder %s13, 1
    %p97 = por %p95, %p96
    %p98 = scmp.ne.s32.totalorder %s87, %s88
    %p99 = scmp.eq.s32.totalorder %s13, 0
    %p100 = por %p98, %p99
    %p101 = scmp.ne.s32.totalorder %s87, %s88
    %p102 = scmp.eq.s32.totalorder %s14, 1
    %p103 = por %p101, %p102
    %p105 = scmp.ne.s32.totalorder %s88, %s104
    %p106 = scmp.eq.s32.totalorder %s14, 0
    %p107 = por %p105, %p106
    %p108 = scmp.le.s32.totalorder 1, %s8
    %p109 = scmp.lt.s32.totalorder %s8, 3
    %p110 = pnand %p108, %p109
    %p111 = pneg %p110
    // Predicated region
    $region9: #{_lambda_.8} parent=5 // pred_check
      _
    $region10: #{_lambda_.8} parent=5 // pred_check_branch
      %113 = sbr.rel (%p110) target = $region12
    $region11: #{_lambda_.8} parent=5 // pred_region
      %s114 = ssub.s32 %s8, 1
      // Predicated region
      $region13: #{_lambda_.8} parent=11 // pred_check
        %p115 = pneg %p72
      $region14: #{_lambda_.8} parent=11 // pred_check_branch
        %117 = sbr.rel (%p115) target = $region16
      $region15: #{_lambda_.8} parent=11 // pred_region
        %p118 = scmp.lt.s32.totalorder %s18, 0
        %s119 = scalar_select %p118, %s18, 0
        %s120 = smul.addr %s119, 4
        %s121 = scalar_lea.vmem %s1, %s120
      $region16: #{_lambda_.8} parent=11 // pred_fallthru
        _
    $region12: #{_lambda_.8} parent=5 // pred_fallthru
      _
    %p122 = scmp.lt.s32.totalorder %s8, 2
    // Predicated region
    $region17: #{_lambda_.8} parent=5 // pred_check
      %p123 = pneg %p122
    $region18: #{_lambda_.8} parent=5 // pred_check_branch
      %125 = sbr.rel (%p123) target = $region20
    $region19: #{_lambda_.8} parent=5 // pred_region
      // Predicated region
      $region21: #{_lambda_.8} parent=19 // pred_check
        %p126 = pneg %p40
      $region22: #{_lambda_.8} parent=19 // pred_check_branch
        %128 = sbr.rel (%p126) target = $region24
      $region23: #{_lambda_.8} parent=19 // pred_region
        %p129 = scmp.lt.s32.totalorder %s15, 1
        %s130 = scalar_select %p129, %s15, 1
        %s131 = smul.addr %s130, 3
        %s132 = smul.addr %s131, 4
        %s133 = scalar_lea.vmem %s0, %s132
      $region24: #{_lambda_.8} parent=19 // pred_fallthru
        _
    $region20: #{_lambda_.8} parent=5 // pred_fallthru
      _
    %p134 = scmp.le.s32.totalorder 1, %s8
    %p135 = scmp.lt.s32.totalorder %s8, 3
    %p136 = pnand %p134, %p135
    %p137 = pneg %p136
    // Predicated region
    $region25: #{_lambda_.8} parent=5 // pred_check
      _
    $region26: #{_lambda_.8} parent=5 // pred_check_branch
      %139 = sbr.rel (%p136) target = $region28
    $region27: #{_lambda_.8} parent=5 // pred_region
      %s140 = ssub.s32 %s8, 1
      %p141 = scmp.lt.s32.totalorder %s17, 1
      %s142 = scalar_select %p141, %s17, 1
      %s143 = smul.addr %s142, 3
      %s144 = smul.addr %s143, 4
      %s145 = scalar_lea.vmem %s0, %s144
      %p146 = pneg %p46
      %p147 = pneg %p43
      %p148 = scmp.lt.s32.totalorder %s18, 0
      %s149 = scalar_select %p148, %s18, 0
      %s150 = smul.addr %s149, 4
      %s151 = scalar_lea.vmem %s1, %s150
      %p152 = pneg %p72
      %p153 = pneg %p69
      %p154 = pneg %p100
      %p155 = pneg %p97
      %p156 = scmp.lt.s32.totalorder %s17, 1
      %s157 = scalar_select %p156, %s17, 1
      %p158 = scmp.lt.s32.totalorder %s18, 0
      %s159 = scalar_select %p158, %s18, 0
      %s160 = smul.addr %s157, 3
      %s161 = sadd.s32 %s159, %s160
      %s162 = smul.addr %s161, 4
      %s163 = scalar_lea.vmem %s2, %s162
      %p164 = scmp.lt.s32.totalorder %s17, 1
      %s165 = scalar_select %p164, %s17, 1
      %s166 = smul.addr %s165, 3
      %s167 = smul.addr %s166, 4
      %s168 = scalar_lea.vmem %s0, %s167
      %p169 = scmp.lt.s32.totalorder %s18, 0
      %s170 = scalar_select %p169, %s18, 0
      %s171 = smul.addr %s170, 4
      %s172 = scalar_lea.vmem %s1, %s171
      %p173 = scmp.lt.s32.totalorder %s17, 1
      %s174 = scalar_select %p173, %s17, 1
      %p175 = scmp.lt.s32.totalorder %s18, 0
      %s176 = scalar_select %p175, %s18, 0
      %s177 = smul.addr %s174, 3
      %s178 = sadd.s32 %s176, %s177
      %s179 = smul.addr %s178, 4
      %s180 = scalar_lea.vmem %s2, %s179
      %v182 = vld [vmem:[%s168] sm:$0xf]
      %v183 = vld [vmem:[%s168 + $0x4] sm:$0xf]
      %v184 = vld [vmem:[%s168 + $0x8] sm:$0x3]
      %v185 = vld [vmem:[%s172] sm:$0xf]
      %v186 = vld [vmem:[%s172 + $0x4] sm:$0xf]
      %s187 = scalar_lea.vmem %s172, 8
      %v188 = vld [vmem:[%s187] sm:$0xf]
      %v189 = vld [vmem:[%s187 + $0x4] sm:$0xf]
      %v193 = vunpack.c.l.b16 %v182
      %v194 = vunpack.c.l.b16 %v183
      %v195 = vunpack.c.l.b16 %v184
      %v196 = vpack.c.b16 %v194, %v193
      %v197 = vpack.c.b16 %v195, %v195
      %vm198 = vsmask.f32 7424
      %v200 = vshrl.u32 %v196, 16
      %v202 = vshll.u32 %v196, 16
      %v204 = vrot.slane %v202, 1
      %v205 = vor.u32 %v200, %v204
      %v207 = vshll.u32 %v197, 16
      %v209 = vrot.slane %v207, 1
      %v210 = vsel %vm198, %v205, %v209
      %v211 = vshrl.u32 %v197, 16
      %v213 = vor.u32 %v211, %v209
      %v216 = vunpack.c.l.b16 %v188
      %v217 = vunpack.c.l.b16 %v189
      %v218 = vpack.c.b16 %v217, %v216
      %vm220 = vcmask 130048
      %v222 = vsel %vm220, %v210, 0
      %v225 = vsel %vm220, %v213, 0
      %227 = vmatprep.subr.bf16.mxu0 0
      %228 = vmatpush1.bf16.msra.mxu0 %v218
      %229 = vmatprep.subr.bf16.mxu0 0
      %230 = vmatpush1.bf16.msra.mxu0 0
      %231 = vmatprep.subr.bf16.mxu0 0
      %232 = vmatpush1.bf16.msra.mxu0 0
      %233 = vmatprep.subr.bf16.mxu0 0
      %234 = vmatpush1.bf16.msra.mxu0 0
      %235 = vmatprep.subr.bf16.mxu0 0
      %236 = vmatpush1.bf16.msra.mxu0 0
      %237 = vmatprep.subr.bf16.mxu0 0
      %238 = vmatpush1.bf16.msra.mxu0 0
      %239 = vmatprep.subr.bf16.mxu0 0
      %240 = vmatpush1.bf16.msra.mxu0 0
      %241 = vmatprep.subr.bf16.mxu0 0
      %242 = vmatpush1.bf16.msra.mxu0 0
      %243 = vmatprep.subr.bf16.mxu0 0
      %244 = vmatpush1.bf16.msra.mxu0 0
      %245 = vmatprep.subr.bf16.mxu0 0
      %246 = vmatpush1.bf16.msra.mxu0 0
      %247 = vmatprep.subr.bf16.mxu0 0
      %248 = vmatpush1.bf16.msra.mxu0 0
      %249 = vmatprep.subr.bf16.mxu0 0
      %250 = vmatpush1.bf16.msra.mxu0 0
      %251 = vmatprep.subr.bf16.mxu0 0
      %252 = vmatpush1.bf16.msra.mxu0 0
      %253 = vmatprep.subr.bf16.mxu0 0
      %254 = vmatpush1.bf16.msra.mxu0 0
      %255 = vmatprep.subr.bf16.mxu0 0
      %256 = vmatpush1.bf16.msra.mxu0 0
      %257 = vmatprep.subr.bf16.mxu0 0
      %258 = vmatpush1.bf16.msra.mxu0 0
      %259 = vmatprep.mubr.bf16.mxu0 0
      %260 = vmatmul.mubr.bf16.gmra.mrb[0].mxu0 %v222
      %v261 = vpop.f32.mrb[0].mxu0
      %v262 = vadd.f32 0.0, %v261
      %v263 = vpop.f32.mrb[0].mxu0
      %v264 = vpop.f32.mrb[0].mxu0
      %v265 = vadd.f32 0.0, %v264
      %v266 = vpop.f32.mrb[0].mxu0
      %267 = vmatprep.mubr.bf16.mxu0 0
      %268 = vmatmul.mubr.bf16.gmra.mrb[0].mxu0 %v225
      %v269 = vpop.f32.mrb[0].mxu0
      %v270 = vadd.f32 0.0, %v269
      %v271 = vpop.f32.mrb[0].mxu0
      %v272 = vpop.f32.mrb[0].mxu0
      %v273 = vpop.f32.mrb[0].mxu0
      %274 = vdwg.mxu0
      %v277 = vunpack.c.l.b16 %v185
      %v278 = vunpack.c.l.b16 %v186
      %v279 = vpack.c.b16 %v278, %v277
      %v281 = vsel %vm220, %v196, 0
      %v283 = vsel %vm220, %v197, 0
      %285 = vmatprep.subr.bf16.mxu0 0
      %286 = vmatpush1.bf16.msra.mxu0 %v279
      %287 = vmatprep.subr.bf16.mxu0 0
      %288 = vmatpush1.bf16.msra.mxu0 0
      %289 = vmatprep.subr.bf16.mxu0 0
      %290 = vmatpush1.bf16.msra.mxu0 0
      %291 = vmatprep.subr.bf16.mxu0 0
      %292 = vmatpush1.bf16.msra.mxu0 0
      %293 = vmatprep.subr.bf16.mxu0 0
      %294 = vmatpush1.bf16.msra.mxu0 0
      %295 = vmatprep.subr.bf16.mxu0 0
      %296 = vmatpush1.bf16.msra.mxu0 0
      %297 = vmatprep.subr.bf16.mxu0 0
      %298 = vmatpush1.bf16.msra.mxu0 0
      %299 = vmatprep.subr.bf16.mxu0 0
      %300 = vmatpush1.bf16.msra.mxu0 0
      %301 = vmatprep.subr.bf16.mxu0 0
      %302 = vmatpush1.bf16.msra.mxu0 0
      %303 = vmatprep.subr.bf16.mxu0 0
      %304 = vmatpush1.bf16.msra.mxu0 0
      %305 = vmatprep.subr.bf16.mxu0 0
      %306 = vmatpush1.bf16.msra.mxu0 0
      %307 = vmatprep.subr.bf16.mxu0 0
      %308 = vmatpush1.bf16.msra.mxu0 0
      %309 = vmatprep.subr.bf16.mxu0 0
      %310 = vmatpush1.bf16.msra.mxu0 0
      %311 = vmatprep.subr.bf16.mxu0 0
      %312 = vmatpush1.bf16.msra.mxu0 0
      %313 = vmatprep.subr.bf16.mxu0 0
      %314 = vmatpush1.bf16.msra.mxu0 0
      %315 = vmatprep.subr.bf16.mxu0 0
      %316 = vmatpush1.bf16.msra.mxu0 0
      %317 = vmatprep.mubr.bf16.mxu0 0
      %318 = vmatmul.mubr.bf16.gmra.mrb[0].mxu0 %v281
      %v319 = vpop.f32.mrb[0].mxu0
      %v320 = vadd.f32 %v262, %v319
      %v321 = vpop.f32.mrb[0].mxu0
      %v322 = vpop.f32.mrb[0].mxu0
      %v323 = vadd.f32 %v265, %v322
      %v324 = vpop.f32.mrb[0].mxu0
      %325 = vmatprep.mubr.bf16.mxu0 0
      %326 = vmatmul.mubr.bf16.gmra.mrb[0].mxu0 %v283
      %v327 = vpop.f32.mrb[0].mxu0
      %v328 = vadd.f32 %v270, %v327
      %v329 = vpop.f32.mrb[0].mxu0
      %v330 = vpop.f32.mrb[0].mxu0
      %v331 = vpop.f32.mrb[0].mxu0
      %332 = vdwg.mxu0
      %v333 = vmul.f32 %v320, 0.5
      %v334 = vmul.f32 %v323, 0.5
      %v335 = vmul.f32 %v328, 0.5
      %v336 = vmul.f32 %v320, 0.044715
      %v337 = vmul.f32 %v323, 0.044715
      %v338 = vmul.f32 %v328, 0.044715
      %v339 = vmul.f32 %v336, %v320
      %v340 = vmul.f32 %v337, %v323
      %v341 = vmul.f32 %v338, %v328
      %v342 = vmul.f32 %v339, %v320
      %v343 = vmul.f32 %v340, %v323
      %v344 = vmul.f32 %v341, %v328
      %v345 = vadd.f32 %v320, %v342
      %v346 = vadd.f32 %v323, %v343
      %v347 = vadd.f32 %v328, %v344
      %v348 = vmul.f32 %v345, 0.7978846
      %v349 = vmul.f32 %v346, 0.7978846
      %v350 = vmul.f32 %v347, 0.7978846
      %v351 = vtanh.pop %v348
      %v352 = vtanh.pop %v349
      %v353 = vtanh.pop %v350
      %v354 = vadd.f32 %v351, 1.0
      %v355 = vadd.f32 %v352, 1.0
      %v356 = vadd.f32 %v353, 1.0
      %v357 = vmul.f32 %v333, %v354
      %v358 = vmul.f32 %v334, %v355
      %v359 = vmul.f32 %v335, %v356
      %v360 = vpack.c.bf16 %v358, %v357
      %v361 = vpack.c.bf16 %v359, %v359
      %v364 = vunpack.c.l.b16 %v360
      %v365 = vunpack.c.h.b16 %v360
      %v366 = vunpack.c.l.b16 %v361
      %v367 = vpack.c.b16 %v364, %v364
      %v368 = vpack.c.b16 %v365, %v365
      %v369 = vpack.c.b16 %v366, %v366
      %vm373 = vcmask 125952
      %374 = vst.msk [vmem:[%s180] sm:$0xf] %vm373, %v367
      %375 = vst.msk [vmem:[%s180 + $0x4] sm:$0xf] %vm373, %v368
      %vm376 = vcmask 123904
      %vm377 = vsmask.f32 1280
      %vm378 = vmand %vm376, %vm377
      %v379 = vld [vmem:[%s180 + $0x8] sm:$0x3]
      %v380 = vsel %vm378, %v369, %v379
      %381 = vst [vmem:[%s180 + $0x8] sm:$0x3] %v380
      %p382 = scmp.lt.s32.totalorder %s17, 1
      %s383 = scalar_select %p382, %s17, 1
      %p384 = scmp.lt.s32.totalorder %s18, 0
      %s385 = scalar_select %p384, %s18, 0
      %s386 = smul.addr %s383, 3
      %s387 = sadd.s32 %s385, %s386
      %s388 = smul.addr %s387, 4
      %s389 = scalar_lea.vmem %s2, %s388
      // Predicated region
      $region29: #{_lambda_.8} parent=27 // pred_check
        %p390 = pneg %p97
      $region30: #{_lambda_.8} parent=27 // pred_check_branch
        %392 = sbr.rel (%p390) target = $region32
      $region31: #{_lambda_.8} parent=27 // pred_region
        _
      $region32: #{_lambda_.8} parent=27 // pred_fallthru
        _
    $region28: #{_lambda_.8} parent=5 // pred_fallthru
      _
    %p393 = scmp.le.s32.totalorder 2, %s8
    // Predicated region
    $region33: #{_lambda_.8} parent=5 // pred_check
      %p394 = pneg %p393
    $region34: #{_lambda_.8} parent=5 // pred_check_branch
      %396 = sbr.rel (%p394) target = $region36
    $region35: #{_lambda_.8} parent=5 // pred_region
      %s397 = ssub.s32 %s8, 2
      // Predicated region
      $region37: #{_lambda_.8} parent=35 // pred_check
        %p398 = pneg %p103
      $region38: #{_lambda_.8} parent=35 // pred_check_branch
        %400 = sbr.rel (%p398) target = $region40
      $region39: #{_lambda_.8} parent=35 // pred_region
        %p401 = scmp.lt.s32.totalorder %s19, 1
        %s402 = scalar_select %p401, %s19, 1
        %p403 = scmp.lt.s32.totalorder %s20, 0
        %s404 = scalar_select %p403, %s20, 0
        %s405 = smul.addr %s402, 3
        %s406 = sadd.s32 %s404, %s405
        %s407 = smul.addr %s406, 4
        %s408 = scalar_lea.vmem %s2, %s407
      $region40: #{_lambda_.8} parent=35 // pred_fallthru
        _
    $region36: #{_lambda_.8} parent=5 // pred_fallthru
      _
  $region6: #{_lambda_.8} parent=0 // loop_footer
    %s12 = sadd.s32 1, %s8
  $region7: #{_lambda_.8} parent=0 // loop_footer_branch
    %7 = sbr.rel target = $region3
  $region8: #{_lambda_.8} parent=0 // loop_exit
    _

// kernel: _lambda_.9
$region0: #{_lambda_.9}
  #allocation0 [shape = 'u32[]', space=smem, size = 0x4, offset = 0x4, fixed_abs, tag = 'smem constant byte address 0x4 - core index']
  #allocation1 [shape = 'u32[144,128]{1,0:T(1,128)}', space=vmem, size = 0x12000, scoped, tag = 'internal scratch']
  %s0 = inlined_call_operand.vmem [shape: bf16[2,10,32], index: 0, kind: input, shape index: {}]
  %s1 = inlined_call_operand.vmem [shape: bf16[2,32,32], index: 1, kind: input, shape index: {}]
  %s2 = inlined_call_operand.vmem [shape: bf16[2,9,32], index: 2, kind: output, shape index: {}]
  %s3 = sld [smem:[#allocation0]]
  $region41: #{_lambda_.9} parent=0
    _
  %s5 = ssub.s32 1, %s3
  %s6 = scalar_select 0, %s5, %s3
  loop: start=0, step=1, limit=4
  $region2: #{_lambda_.9} parent=0 // loop_pre_header
    _
  $region3: #{_lambda_.9} parent=0 // loop_header
    %s8 = sphi 0, %s12
    %p9 = scmp.ge.s32.totalorder %s8, 4
    %s15 = sphi 0, %s27
    %s16 = sphi 0, %s23
    %s17 = sphi 0, %s15
    %s18 = sphi 0, %s16
    %s19 = sphi 0, %s17
    %s20 = sphi 0, %s18
    %s30 = sphi 0, %s32
    %s33 = sphi 0, %s30
    %s34 = sphi 0, %s33
    %s50 = sphi 0, %s34
    %s56 = sphi 0, %s58
    %s59 = sphi 0, %s56
    %s60 = sphi 0, %s59
    %s76 = sphi 0, %s60
    %s84 = sphi 0, %s86
    %s87 = sphi 0, %s84
    %s88 = sphi 0, %s87
    %s104 = sphi 0, %s88
  $region4: #{_lambda_.9} parent=0 // loop_header_branch
    %11 = sbr.rel (%p9) target = $region8
  $region5: #{_lambda_.9} parent=0 // loop_body
    %s13 = ssub.s32 %s8, 1
    %s14 = ssub.s32 %s8, 2
    %s21 = sadd.s32 1, %s16
    %p22 = scmp.ge.s32.totalorder %s21, 1
    %s23 = scalar_select %p22, 0, %s21
    %s24 = sadd.s32 1, %s15
    %s25 = scalar_select %p22, %s24, %s15
    %p26 = scmp.ge.s32.totalorder %s25, 2
    %s27 = scalar_select %p26, 0, %s25
    %s28 = ssub.s32 %s15, %s27
    %p29 = scmp.eq.s32.totalorder %s28, 0
    %s31 = sadd.s32 %s30, 1
    %s32 = scalar_select %p29, %s30, %s31
    %p35 = pneg %p29
    %p36 = scmp.eq.s32.totalorder %s8, 1
    %p37 = por %p35, %p36
    %p38 = scmp.ne.s32.totalorder %s30, %s33
    %p39 = scmp.eq.s32.totalorder %s8, 0
    %p40 = por %p38, %p39
    %p41 = scmp.ne.s32.totalorder %s30, %s33
    %p42 = scmp.eq.s32.totalorder %s13, 1
    %p43 = por %p41, %p42
    %p44 = scmp.ne.s32.totalorder %s33, %s34
    %p45 = scmp.eq.s32.totalorder %s13, 0
    %p46 = por %p44, %p45
    %p47 = scmp.ne.s32.totalorder %s33, %s34
    %p48 = scmp.eq.s32.totalorder %s14, 1
    %p49 = por %p47, %p48
    %p51 = scmp.ne.s32.totalorder %s34, %s50
    %p52 = scmp.eq.s32.totalorder %s14, 0
    %p53 = por %p51, %p52
    %s54 = ssub.s32 %s16, %s23
    %p55 = scmp.eq.s32.totalorder %s54, 0
    %s57 = sadd.s32 %s56, 1
    %s58 = scalar_select %p55, %s56, %s57
    %p61 = pneg %p55
    %p62 = scmp.eq.s32.totalorder %s8, 1
    %p63 = por %p61, %p62
    %p64 = scmp.ne.s32.totalorder %s56, %s59
    %p65 = scmp.eq.s32.totalorder %s8, 0
    %p66 = por %p64, %p65
    %p67 = scmp.ne.s32.totalorder %s56, %s59
    %p68 = scmp.eq.s32.totalorder %s13, 1
    %p69 = por %p67, %p68
    %p70 = scmp.ne.s32.totalorder %s59, %s60
    %p71 = scmp.eq.s32.totalorder %s13, 0
    %p72 = por %p70, %p71
    %p73 = scmp.ne.s32.totalorder %s59, %s60
    %p74 = scmp.eq.s32.totalorder %s14, 1
    %p75 = por %p73, %p74
    %p77 = scmp.ne.s32.totalorder %s60, %s76
    %p78 = scmp.eq.s32.totalorder %s14, 0
    %p79 = por %p77, %p78
    %s80 = ssub.s32 %s15, %s27
    %s81 = ssub.s32 %s16, %s23
    %s82 = sor.u32 %s80, %s81
    %p83 = scmp.eq.s32.totalorder %s82, 0
    %s85 = sadd.s32 %s84, 1
    %s86 = scalar_select %p83, %s84, %s85
    %p89 = pneg %p83
    %p90 = scmp.eq.s32.totalorder %s8, 1
    %p91 = por %p89, %p90
    %p92 = scmp.ne.s32.totalorder %s84, %s87
    %p93 = scmp.eq.s32.totalorder %s8, 0
    %p94 = por %p92, %p93
    %p95 = scmp.ne.s32.totalorder %s84, %s87
    %p96 = scmp.eq.s32.totalorder %s13, 1
    %p97 = por %p95, %p96
    %p98 = scmp.ne.s32.totalorder %s87, %s88
    %p99 = scmp.eq.s32.totalorder %s13, 0
    %p100 = por %p98, %p99
    %p101 = scmp.ne.s32.totalorder %s87, %s88
    %p102 = scmp.eq.s32.totalorder %s14, 1
    %p103 = por %p101, %p102
    %p105 = scmp.ne.s32.totalorder %s88, %s104
    %p106 = scmp.eq.s32.totalorder %s14, 0
    %p107 = por %p105, %p106
    %p108 = scmp.le.s32.totalorder 1, %s8
    %p109 = scmp.lt.s32.totalorder %s8, 3
    %p110 = pnand %p108, %p109
    %p111 = pneg %p110
    // Predicated region
    $region9: #{_lambda_.9} parent=5 // pred_check
      _
    $region10: #{_lambda_.9} parent=5 // pred_check_branch
      %113 = sbr.rel (%p110) target = $region12
    $region11: #{_lambda_.9} parent=5 // pred_region
      %s114 = ssub.s32 %s8, 1
      // Predicated region
      $region13: #{_lambda_.9} parent=11 // pred_check
        %p115 = pneg %p72
      $region14: #{_lambda_.9} parent=11 // pred_check_branch
        %117 = sbr.rel (%p115) target = $region16
      $region15: #{_lambda_.9} parent=11 // pred_region
        %p118 = scmp.lt.s32.totalorder %s18, 0
        %s119 = scalar_select %p118, %s18, 0
        %s120 = smul.addr %s119, 4
        %s121 = scalar_lea.vmem %s1, %s120
      $region16: #{_lambda_.9} parent=11 // pred_fallthru
        _
    $region12: #{_lambda_.9} parent=5 // pred_fallthru
      _
    %p122 = scmp.lt.s32.totalorder %s8, 2
    // Predicated region
    $region17: #{_lambda_.9} parent=5 // pred_check
      %p123 = pneg %p122
    $region18: #{_lambda_.9} parent=5 // pred_check_branch
      %125 = sbr.rel (%p123) target = $region20
    $region19: #{_lambda_.9} parent=5 // pred_region
      // Predicated region
      $region21: #{_lambda_.9} parent=19 // pred_check
        %p126 = pneg %p40
      $region22: #{_lambda_.9} parent=19 // pred_check_branch
        %128 = sbr.rel (%p126) target = $region24
      $region23: #{_lambda_.9} parent=19 // pred_region
        %p129 = scmp.lt.s32.totalorder %s15, 1
        %s130 = scalar_select %p129, %s15, 1
        %s131 = smul.addr %s130, 2
        %s132 = smul.addr %s131, 4
        %s133 = scalar_lea.vmem %s0, %s132
      $region24: #{_lambda_.9} parent=19 // pred_fallthru
        _
    $region20: #{_lambda_.9} parent=5 // pred_fallthru
      _
    %p134 = scmp.le.s32.totalorder 1, %s8
    %p135 = scmp.lt.s32.totalorder %s8, 3
    %p136 = pnand %p134, %p135
    %p137 = pneg %p136
    // Predicated region
    $region25: #{_lambda_.9} parent=5 // pred_check
      _
    $region26: #{_lambda_.9} parent=5 // pred_check_branch
      %139 = sbr.rel (%p136) target = $region28
    $region27: #{_lambda_.9} parent=5 // pred_region
      %s140 = ssub.s32 %s8, 1
      %p141 = scmp.lt.s32.totalorder %s17, 1
      %s142 = scalar_select %p141, %s17, 1
      %s143 = smul.addr %s142, 2
      %s144 = smul.addr %s143, 4
      %s145 = scalar_lea.vmem %s0, %s144
      %p146 = pneg %p46
      %p147 = pneg %p43
      %p148 = scmp.lt.s32.totalorder %s18, 0
      %s149 = scalar_select %p148, %s18, 0
      %s150 = smul.addr %s149, 4
      %s151 = scalar_lea.vmem %s1, %s150
      %p152 = pneg %p72
      %p153 = pneg %p69
      %p154 = pneg %p100
      %p155 = pneg %p97
      %p156 = scmp.lt.s32.totalorder %s17, 1
      %s157 = scalar_select %p156, %s17, 1
      %p158 = scmp.lt.s32.totalorder %s18, 0
      %s159 = scalar_select %p158, %s18, 0
      %s160 = smul.addr %s157, 2
      %s161 = sadd.s32 %s159, %s160
      %s162 = smul.addr %s161, 4
      %s163 = scalar_lea.vmem %s2, %s162
      %p164 = scmp.lt.s32.totalorder %s17, 1
      %s165 = scalar_select %p164, %s17, 1
      %s166 = smul.addr %s165, 2
      %s167 = smul.addr %s166, 4
      %s168 = scalar_lea.vmem %s0, %s167
      %p169 = scmp.lt.s32.totalorder %s18, 0
      %s170 = scalar_select %p169, %s18, 0
      %s171 = smul.addr %s170, 4
      %s172 = scalar_lea.vmem %s1, %s171
      %p173 = scmp.lt.s32.totalorder %s17, 1
      %s174 = scalar_select %p173, %s17, 1
      %p175 = scmp.lt.s32.totalorder %s18, 0
      %s176 = scalar_select %p175, %s18, 0
      %s177 = smul.addr %s174, 2
      %s178 = sadd.s32 %s176, %s177
      %s179 = smul.addr %s178, 4
      %s180 = scalar_lea.vmem %s2, %s179
      %v182 = vld [vmem:[%s168] sm:$0xf]
      %v183 = vld [vmem:[%s168 + $0x4] sm:$0x1]
      %v184 = vld [vmem:[%s172] sm:$0xf]
      %v185 = vld [vmem:[%s172 + $0x4] sm:$0xf]
      %v186 = vld [vmem:[%s172 + $0x8] sm:$0xf]
      %v187 = vld [vmem:[%s172 + $0xc] sm:$0xf]
      %s188 = scalar_lea.vmem %s172, 16
      %v189 = vld [vmem:[%s188] sm:$0xf]
      %v190 = vld [vmem:[%s188 + $0x4] sm:$0xf]
      %v191 = vld [vmem:[%s188 + $0x8] sm:$0xf]
      %v192 = vld [vmem:[%s188 + $0xc] sm:$0xf]
      %v195 = vunpack.c.l.b16 %v182
      %v196 = vunpack.c.l.b16 %v183
      %v197 = vpack.c.b16 %v196, %v195
      %v199 = vshrl.u32 %v197, 16
      %v201 = vshll.u32 %v197, 16
      %v203 = vrot.slane %v201, 1
      %v204 = vor.u32 %v199, %v203
      %v209 = vunpack.c.l.b16 %v189
      %v210 = vunpack.c.l.b16 %v190
      %v211 = vunpack.c.l.b16 %v191
      %v212 = vunpack.c.l.b16 %v192
      %v213 = vpack.c.b16 %v210, %v209
      %v214 = vpack.c.b16 %v212, %v211
      %vm217 = vcmask 261120
      %v219 = vsel %vm217, %v204, 0
      %221 = vmatprep.subr.bf16.mxu0 0
      %222 = vmatpush1.bf16.msra.mxu0 %v213
      %223 = vmatprep.subr.bf16.mxu0 0
      %224 = vmatpush1.bf16.msra.mxu0 %v214
      %225 = vmatprep.subr.bf16.mxu0 0
      %226 = vmatpush1.bf16.msra.mxu0 0
      %227 = vmatprep.subr.bf16.mxu0 0
      %228 = vmatpush1.bf16.msra.mxu0 0
      %229 = vmatprep.subr.bf16.mxu0 0
      %230 = vmatpush1.bf16.msra.mxu0 0
      %231 = vmatprep.subr.bf16.mxu0 0
      %232 = vmatpush1.bf16.msra.mxu0 0
      %233 = vmatprep.subr.bf16.mxu0 0
      %234 = vmatpush1.bf16.msra.mxu0 0
      %235 = vmatprep.subr.bf16.mxu0 0
      %236 = vmatpush1.bf16.msra.mxu0 0
      %237 = vmatprep.subr.bf16.mxu0 0
      %238 = vmatpush1.bf16.msra.mxu0 0
      %239 = vmatprep.subr.bf16.mxu0 0
      %240 = vmatpush1.bf16.msra.mxu0 0
      %241 = vmatprep.subr.bf16.mxu0 0
      %242 = vmatpush1.bf16.msra.mxu0 0
      %243 = vmatprep.subr.bf16.mxu0 0
      %244 = vmatpush1.bf16.msra.mxu0 0
      %245 = vmatprep.subr.bf16.mxu0 0
      %246 = vmatpush1.bf16.msra.mxu0 0
      %247 = vmatprep.subr.bf16.mxu0 0
      %248 = vmatpush1.bf16.msra.mxu0 0
      %249 = vmatprep.subr.bf16.mxu0 0
      %250 = vmatpush1.bf16.msra.mxu0 0
      %251 = vmatprep.subr.bf16.mxu0 0
      %252 = vmatpush1.bf16.msra.mxu0 0
      %253 = vmatprep.mubr.bf16.mxu0 0
      %254 = vmatmul.mubr.bf16.gmra.mrb[0].mxu0 %v219
      %v255 = vpop.f32.mrb[0].mxu0
      %v256 = vadd.f32 0.0, %v255
      %v257 = vpop.f32.mrb[0].mxu0
      %v258 = vpop.f32.mrb[0].mxu0
      %v259 = vadd.f32 0.0, %v258
      %v260 = vpop.f32.mrb[0].mxu0
      %261 = vdwg.mxu0
      %v266 = vunpack.c.l.b16 %v184
      %v267 = vunpack.c.l.b16 %v185
      %v268 = vunpack.c.l.b16 %v186
      %v269 = vunpack.c.l.b16 %v187
      %v270 = vpack.c.b16 %v267, %v266
      %v271 = vpack.c.b16 %v269, %v268
      %v274 = vsel %vm217, %v197, 0
      %276 = vmatprep.subr.bf16.mxu0 0
      %277 = vmatpush1.bf16.msra.mxu0 %v270
      %278 = vmatprep.subr.bf16.mxu0 0
      %279 = vmatpush1.bf16.msra.mxu0 %v271
      %280 = vmatprep.subr.bf16.mxu0 0
      %281 = vmatpush1.bf16.msra.mxu0 0
      %282 = vmatprep.subr.bf16.mxu0 0
      %283 = vmatpush1.bf16.msra.mxu0 0
      %284 = vmatprep.subr.bf16.mxu0 0
      %285 = vmatpush1.bf16.msra.mxu0 0
      %286 = vmatprep.subr.bf16.mxu0 0
      %287 = vmatpush1.bf16.msra.mxu0 0
      %288 = vmatprep.subr.bf16.mxu0 0
      %289 = vmatpush1.bf16.msra.mxu0 0
      %290 = vmatprep.subr.bf16.mxu0 0
      %291 = vmatpush1.bf16.msra.mxu0 0
      %292 = vmatprep.subr.bf16.mxu0 0
      %293 = vmatpush1.bf16.msra.mxu0 0
      %294 = vmatprep.subr.bf16.mxu0 0
      %295 = vmatpush1.bf16.msra.mxu0 0
      %296 = vmatprep.subr.bf16.mxu0 0
      %297 = vmatpush1.bf16.msra.mxu0 0
      %298 = vmatprep.subr.bf16.mxu0 0
      %299 = vmatpush1.bf16.msra.mxu0 0
      %300 = vmatprep.subr.bf16.mxu0 0
      %301 = vmatpush1.bf16.msra.mxu0 0
      %302 = vmatprep.subr.bf16.mxu0 0
      %303 = vmatpush1.bf16.msra.mxu0 0
      %304 = vmatprep.subr.bf16.mxu0 0
      %305 = vmatpush1.bf16.msra.mxu0 0
      %306 = vmatprep.subr.bf16.mxu0 0
      %307 = vmatpush1.bf16.msra.mxu0 0
      %308 = vmatprep.mubr.bf16.mxu0 0
      %309 = vmatmul.mubr.bf16.gmra.mrb[0].mxu0 %v274
      %v310 = vpop.f32.mrb[0].mxu0
      %v311 = vadd.f32 %v256, %v310
      %v312 = vpop.f32.mrb[0].mxu0
      %v313 = vpop.f32.mrb[0].mxu0
      %v314 = vadd.f32 %v259, %v313
      %v315 = vpop.f32.mrb[0].mxu0
      %316 = vdwg.mxu0
      %v317 = vmul.f32 %v311, 0.5
      %v318 = vmul.f32 %v314, 0.5
      %v319 = vmul.f32 %v311, 0.044715
      %v320 = vmul.f32 %v314, 0.044715
      %v321 = vmul.f32 %v319, %v311
      %v322 = vmul.f32 %v320, %v314
      %v323 = vmul.f32 %v321, %v311
      %v324 = vmul.f32 %v322, %v314
      %v325 = vadd.f32 %v311, %v323
      %v326 = vadd.f32 %v314, %v324
      %v327 = vmul.f32 %v325, 0.7978846
      %v328 = vmul.f32 %v326, 0.7978846
      %v329 = vtanh.pop %v327
      %v330 = vtanh.pop %v328
      %v331 = vadd.f32 %v329, 1.0
      %v332 = vadd.f32 %v330, 1.0
      %v333 = vmul.f32 %v317, %v331
      %v334 = vmul.f32 %v318, %v332
      %v335 = vpack.c.bf16 %v334, %v333
      %v337 = vunpack.c.l.b16 %v335
      %v338 = vunpack.c.h.b16 %v335
      %v339 = vpack.c.b16 %v337, %v337
      %v340 = vpack.c.b16 %v338, %v338
      %vm343 = vcmask 257024
      %344 = vst.msk [vmem:[%s180] sm:$0xf] %vm343, %v339
      %vm345 = vcmask 253952
      %vm346 = vsmask.f32 256
      %vm347 = vmand %vm345, %vm346
      %v348 = vld [vmem:[%s180 + $0x4] sm:$0x1]
      %v349 = vsel %vm347, %v340, %v348
      %350 = vst [vmem:[%s180 + $0x4] sm:$0x1] %v349
      %p351 = scmp.lt.s32.totalorder %s17, 1
      %s352 = scalar_select %p351, %s17, 1
      %p353 = scmp.lt.s32.totalorder %s18, 0
      %s354 = scalar_select %p353, %s18, 0
      %s355 = smul.addr %s352, 2
      %s356 = sadd.s32 %s354, %s355
      %s357 = smul.addr %s356, 4
      %s358 = scalar_lea.vmem %s2, %s357
      // Predicated region
      $region29: #{_lambda_.9} parent=27 // pred_check
        %p359 = pneg %p97
      $region30: #{_lambda_.9} parent=27 // pred_check_branch
        %361 = sbr.rel (%p359) target = $region32
      $region31: #{_lambda_.9} parent=27 // pred_region
        _
      $region32: #{_lambda_.9} parent=27 // pred_fallthru
        _
    $region28: #{_lambda_.9} parent=5 // pred_fallthru
      _
    %p362 = scmp.le.s32.totalorder 2, %s8
    // Predicated region
    $region33: #{_lambda_.9} parent=5 // pred_check
      %p363 = pneg %p362
    $region34: #{_lambda_.9} parent=5 // pred_check_branch
      %365 = sbr.rel (%p363) target = $region36
    $region35: #{_lambda_.9} parent=5 // pred_region
      %s366 = ssub.s32 %s8, 2
      // Predicated region
      $region37: #{_lambda_.9} parent=35 // pred_check
        %p367 = pneg %p103
      $region38: #{_lambda_.9} parent=35 // pred_check_branch
        %369 = sbr.rel (%p367) target = $region40
      $region39: #{_lambda_.9} parent=35 // pred_region
        %p370 = scmp.lt.s32.totalorder %s19, 1
        %s371 = scalar_select %p370, %s19, 1
        %p372 = scmp.lt.s32.totalorder %s20, 0
        %s373 = scalar_select %p372, %s20, 0
        %s374 = smul.addr %s371, 2
        %s375 = sadd.s32 %s373, %s374
        %s376 = smul.addr %s375, 4
        %s377 = scalar_lea.vmem %s2, %s376
      $region40: #{_lambda_.9} parent=35 // pred_fallthru
        _
    $region36: #{_lambda_.9} parent=5 // pred_fallthru
      _
  $region6: #{_lambda_.9} parent=0 // loop_footer
    %s12 = sadd.s32 1, %s8
  $region7: #{_lambda_.9} parent=0 // loop_footer_branch
    %7 = sbr.rel target = $region3
  $region8: #{_lambda_.9} parent=0 // loop_exit
    _

// kernel: _lambda_.10
$region0: #{_lambda_.10}
  #allocation0 [shape = 'u32[]', space=smem, size = 0x4, offset = 0x4, fixed_abs, tag = 'smem constant byte address 0x4 - core index']
  #allocation1 [shape = 'u32[144,128]{1,0:T(1,128)}', space=vmem, size = 0x12000, scoped, tag = 'internal scratch']
  %s0 = inlined_call_operand.vmem [shape: bf16[2,5,64], index: 0, kind: input, shape index: {}]
  %s1 = inlined_call_operand.vmem [shape: bf16[2,64,32], index: 1, kind: input, shape index: {}]
  %s2 = inlined_call_operand.vmem [shape: bf16[2,4,32], index: 2, kind: output, shape index: {}]
  %s3 = sld [smem:[#allocation0]]
  $region41: #{_lambda_.10} parent=0
    _
  %s5 = ssub.s32 1, %s3
  %s6 = scalar_select 0, %s5, %s3
  loop: start=0, step=1, limit=4
  $region2: #{_lambda_.10} parent=0 // loop_pre_header
    _
  $region3: #{_lambda_.10} parent=0 // loop_header
    %s8 = sphi 0, %s12
    %p9 = scmp.ge.s32.totalorder %s8, 4
    %s15 = sphi 0, %s27
    %s16 = sphi 0, %s23
    %s17 = sphi 0, %s15
    %s18 = sphi 0, %s16
    %s19 = sphi 0, %s17
    %s20 = sphi 0, %s18
    %s30 = sphi 0, %s32
    %s33 = sphi 0, %s30
    %s34 = sphi 0, %s33
    %s50 = sphi 0, %s34
    %s56 = sphi 0, %s58
    %s59 = sphi 0, %s56
    %s60 = sphi 0, %s59
    %s76 = sphi 0, %s60
    %s84 = sphi 0, %s86
    %s87 = sphi 0, %s84
    %s88 = sphi 0, %s87
    %s104 = sphi 0, %s88
  $region4: #{_lambda_.10} parent=0 // loop_header_branch
    %11 = sbr.rel (%p9) target = $region8
  $region5: #{_lambda_.10} parent=0 // loop_body
    %s13 = ssub.s32 %s8, 1
    %s14 = ssub.s32 %s8, 2
    %s21 = sadd.s32 1, %s16
    %p22 = scmp.ge.s32.totalorder %s21, 1
    %s23 = scalar_select %p22, 0, %s21
    %s24 = sadd.s32 1, %s15
    %s25 = scalar_select %p22, %s24, %s15
    %p26 = scmp.ge.s32.totalorder %s25, 2
    %s27 = scalar_select %p26, 0, %s25
    %s28 = ssub.s32 %s15, %s27
    %p29 = scmp.eq.s32.totalorder %s28, 0
    %s31 = sadd.s32 %s30, 1
    %s32 = scalar_select %p29, %s30, %s31
    %p35 = pneg %p29
    %p36 = scmp.eq.s32.totalorder %s8, 1
    %p37 = por %p35, %p36
    %p38 = scmp.ne.s32.totalorder %s30, %s33
    %p39 = scmp.eq.s32.totalorder %s8, 0
    %p40 = por %p38, %p39
    %p41 = scmp.ne.s32.totalorder %s30, %s33
    %p42 = scmp.eq.s32.totalorder %s13, 1
    %p43 = por %p41, %p42
    %p44 = scmp.ne.s32.totalorder %s33, %s34
    %p45 = scmp.eq.s32.totalorder %s13, 0
    %p46 = por %p44, %p45
    %p47 = scmp.ne.s32.totalorder %s33, %s34
    %p48 = scmp.eq.s32.totalorder %s14, 1
    %p49 = por %p47, %p48
    %p51 = scmp.ne.s32.totalorder %s34, %s50
    %p52 = scmp.eq.s32.totalorder %s14, 0
    %p53 = por %p51, %p52
    %s54 = ssub.s32 %s16, %s23
    %p55 = scmp.eq.s32.totalorder %s54, 0
    %s57 = sadd.s32 %s56, 1
    %s58 = scalar_select %p55, %s56, %s57
    %p61 = pneg %p55
    %p62 = scmp.eq.s32.totalorder %s8, 1
    %p63 = por %p61, %p62
    %p64 = scmp.ne.s32.totalorder %s56, %s59
    %p65 = scmp.eq.s32.totalorder %s8, 0
    %p66 = por %p64, %p65
    %p67 = scmp.ne.s32.totalorder %s56, %s59
    %p68 = scmp.eq.s32.totalorder %s13, 1
    %p69 = por %p67, %p68
    %p70 = scmp.ne.s32.totalorder %s59, %s60
    %p71 = scmp.eq.s32.totalorder %s13, 0
    %p72 = por %p70, %p71
    %p73 = scmp.ne.s32.totalorder %s59, %s60
    %p74 = scmp.eq.s32.totalorder %s14, 1
    %p75 = por %p73, %p74
    %p77 = scmp.ne.s32.totalorder %s60, %s76
    %p78 = scmp.eq.s32.totalorder %s14, 0
    %p79 = por %p77, %p78
    %s80 = ssub.s32 %s15, %s27
    %s81 = ssub.s32 %s16, %s23
    %s82 = sor.u32 %s80, %s81
    %p83 = scmp.eq.s32.totalorder %s82, 0
    %s85 = sadd.s32 %s84, 1
    %s86 = scalar_select %p83, %s84, %s85
    %p89 = pneg %p83
    %p90 = scmp.eq.s32.totalorder %s8, 1
    %p91 = por %p89, %p90
    %p92 = scmp.ne.s32.totalorder %s84, %s87
    %p93 = scmp.eq.s32.totalorder %s8, 0
    %p94 = por %p92, %p93
    %p95 = scmp.ne.s32.totalorder %s84, %s87
    %p96 = scmp.eq.s32.totalorder %s13, 1
    %p97 = por %p95, %p96
    %p98 = scmp.ne.s32.totalorder %s87, %s88
    %p99 = scmp.eq.s32.totalorder %s13, 0
    %p100 = por %p98, %p99
    %p101 = scmp.ne.s32.totalorder %s87, %s88
    %p102 = scmp.eq.s32.totalorder %s14, 1
    %p103 = por %p101, %p102
    %p105 = scmp.ne.s32.totalorder %s88, %s104
    %p106 = scmp.eq.s32.totalorder %s14, 0
    %p107 = por %p105, %p106
    %p108 = scmp.le.s32.totalorder 1, %s8
    %p109 = scmp.lt.s32.totalorder %s8, 3
    %p110 = pnand %p108, %p109
    %p111 = pneg %p110
    // Predicated region
    $region9: #{_lambda_.10} parent=5 // pred_check
      _
    $region10: #{_lambda_.10} parent=5 // pred_check_branch
      %113 = sbr.rel (%p110) target = $region12
    $region11: #{_lambda_.10} parent=5 // pred_region
      %s114 = ssub.s32 %s8, 1
      // Predicated region
      $region13: #{_lambda_.10} parent=11 // pred_check
        %p115 = pneg %p72
      $region14: #{_lambda_.10} parent=11 // pred_check_branch
        %117 = sbr.rel (%p115) target = $region16
      $region15: #{_lambda_.10} parent=11 // pred_region
        %p118 = scmp.lt.s32.totalorder %s18, 0
        %s119 = scalar_select %p118, %s18, 0
        %s120 = smul.addr %s119, 4
        %s121 = scalar_lea.vmem %s1, %s120
      $region16: #{_lambda_.10} parent=11 // pred_fallthru
        _
    $region12: #{_lambda_.10} parent=5 // pred_fallthru
      _
    %p122 = scmp.lt.s32.totalorder %s8, 2
    // Predicated region
    $region17: #{_lambda_.10} parent=5 // pred_check
      %p123 = pneg %p122
    $region18: #{_lambda_.10} parent=5 // pred_check_branch
      %125 = sbr.rel (%p123) target = $region20
    $region19: #{_lambda_.10} parent=5 // pred_region
      // Predicated region
      $region21: #{_lambda_.10} parent=19 // pred_check
        %p126 = pneg %p40
      $region22: #{_lambda_.10} parent=19 // pred_check_branch
        %128 = sbr.rel (%p126) target = $region24
      $region23: #{_lambda_.10} parent=19 // pred_region
        %p129 = scmp.lt.s32.totalorder %s15, 1
        %s130 = scalar_select %p129, %s15, 1
        %s131 = smul.addr %s130, 4
        %s132 = scalar_lea.vmem %s0, %s131
      $region24: #{_lambda_.10} parent=19 // pred_fallthru
        _
    $region20: #{_lambda_.10} parent=5 // pred_fallthru
      _
    %p133 = scmp.le.s32.totalorder 1, %s8
    %p134 = scmp.lt.s32.totalorder %s8, 3
    %p135 = pnand %p133, %p134
    %p136 = pneg %p135
    // Predicated region
    $region25: #{_lambda_.10} parent=5 // pred_check
      _
    $region26: #{_lambda_.10} parent=5 // pred_check_branch
      %138 = sbr.rel (%p135) target = $region28
    $region27: #{_lambda_.10} parent=5 // pred_region
      %s139 = ssub.s32 %s8, 1
      %p140 = scmp.lt.s32.totalorder %s17, 1
      %s141 = scalar_select %p140, %s17, 1
      %s142 = smul.addr %s141, 4
      %s143 = scalar_lea.vmem %s0, %s142
      %p144 = pneg %p46
      %p145 = pneg %p43
      %p146 = scmp.lt.s32.totalorder %s18, 0
      %s147 = scalar_select %p146, %s18, 0
      %s148 = smul.addr %s147, 4
      %s149 = scalar_lea.vmem %s1, %s148
      %p150 = pneg %p72
      %p151 = pneg %p69
      %p152 = pneg %p100
      %p153 = pneg %p97
      %p154 = scmp.lt.s32.totalorder %s17, 1
      %s155 = scalar_select %p154, %s17, 1
      %p156 = scmp.lt.s32.totalorder %s18, 0
      %s157 = scalar_select %p156, %s18, 0
      %s158 = sadd.s32 %s157, %s155
      %s159 = smul.addr %s158, 2
      %s160 = scalar_lea.vmem %s2, %s159
      %p161 = scmp.lt.s32.totalorder %s17, 1
      %s162 = scalar_select %p161, %s17, 1
      %s163 = smul.addr %s162, 4
      %s164 = scalar_lea.vmem %s0, %s163
      %p165 = scmp.lt.s32.totalorder %s18, 0
      %s166 = scalar_select %p165, %s18, 0
      %s167 = smul.addr %s166, 4
      %s168 = scalar_lea.vmem %s1, %s167
      %p169 = scmp.lt.s32.totalorder %s17, 1
      %s170 = scalar_select %p169, %s17, 1
      %p171 = scmp.lt.s32.totalorder %s18, 0
      %s172 = scalar_select %p171, %s18, 0
      %s173 = sadd.s32 %s172, %s170
      %s174 = smul.addr %s173, 2
      %s175 = scalar_lea.vmem %s2, %s174
      %v177 = vld [vmem:[%s164] sm:$0x3]
      %v178 = vld [vmem:[%s168] sm:$0xf]
      %v179 = vld [vmem:[%s168 + $0x4] sm:$0xf]
      %v180 = vld [vmem:[%s168 + $0x8] sm:$0xf]
      %v181 = vld [vmem:[%s168 + $0xc] sm:$0xf]
      %v182 = vld [vmem:[%s168 + $0x10] sm:$0xf]
      %v183 = vld [vmem:[%s168 + $0x14] sm:$0xf]
      %v184 = vld [vmem:[%s168 + $0x18] sm:$0xf]
      %v185 = vld [vmem:[%s168 + $0x1c] sm:$0xf]
      %v186 = vld [vmem:[%s164] sm:$0x7]
      %s187 = scalar_lea.vmem %s168, 32
      %v188 = vld [vmem:[%s187] sm:$0xf]
      %v189 = vld [vmem:[%s187 + $0x4] sm:$0xf]
      %v190 = vld [vmem:[%s187 + $0x8] sm:$0xf]
      %v191 = vld [vmem:[%s187 + $0xc] sm:$0xf]
      %v192 = vld [vmem:[%s187 + $0x10] sm:$0xf]
      %v193 = vld [vmem:[%s187 + $0x14] sm:$0xf]
      %v194 = vld [vmem:[%s187 + $0x18] sm:$0xf]
      %v195 = vld [vmem:[%s187 + $0x1c] sm:$0xf]
      %v197 = vunpack.c.l.b16 %v186
      %v198 = vpack.c.b16 %v197, %v197
      %v200 = vshrl.u32 %v198, 16
      %v202 = vshll.u32 %v198, 16
      %v204 = vrot.slane %v202, 1
      %v205 = vor.u32 %v200, %v204
      %v214 = vunpack.c.l.b16 %v188
      %v215 = vunpack.c.l.b16 %v189
      %v216 = vunpack.c.l.b16 %v190
      %v217 = vunpack.c.l.b16 %v191
      %v218 = vunpack.c.l.b16 %v192
      %v219 = vunpack.c.l.b16 %v193
      %v220 = vunpack.c.l.b16 %v194
      %v221 = vunpack.c.l.b16 %v195
      %v222 = vpack.c.b16 %v215, %v214
      %v223 = vpack.c.b16 %v217, %v216
      %v224 = vpack.c.b16 %v219, %v218
      %v225 = vpack.c.b16 %v221, %v220
      %vm230 = vcmask 523264
      %v232 = vsel %vm230, %v205, 0
      %234 = vmatprep.subr.bf16.mxu0 0
      %235 = vmatpush1.bf16.msra.mxu0 %v222
      %236 = vmatprep.subr.bf16.mxu0 0
      %237 = vmatpush1.bf16.msra.mxu0 %v223
      %238 = vmatprep.subr.bf16.mxu0 0
      %239 = vmatpush1.bf16.msra.mxu0 %v224
      %240 = vmatprep.subr.bf16.mxu0 0
      %241 = vmatpush1.bf16.msra.mxu0 %v225
      %242 = vmatprep.subr.bf16.mxu0 0
      %243 = vmatpush1.bf16.msra.mxu0 0
      %244 = vmatprep.subr.bf16.mxu0 0
      %245 = vmatpush1.bf16.msra.mxu0 0
      %246 = vmatprep.subr.bf16.mxu0 0
      %247 = vmatpush1.bf16.msra.mxu0 0
      %248 = vmatprep.subr.bf16.mxu0 0
      %249 = vmatpush1.bf16.msra.mxu0 0
      %250 = vmatprep.subr.bf16.mxu0 0
      %251 = vmatpush1.bf16.msra.mxu0 0
      %252 = vmatprep.subr.bf16.mxu0 0
      %253 = vmatpush1.bf16.msra.mxu0 0
      %254 = vmatprep.subr.bf16.mxu0 0
      %255 = vmatpush1.bf16.msra.mxu0 0
      %256 = vmatprep.subr.bf16.mxu0 0
      %257 = vmatpush1.bf16.msra.mxu0 0
      %258 = vmatprep.subr.bf16.mxu0 0
      %259 = vmatpush1.bf16.msra.mxu0 0
      %260 = vmatprep.subr.bf16.mxu0 0
      %261 = vmatpush1.bf16.msra.mxu0 0
      %262 = vmatprep.subr.bf16.mxu0 0
      %263 = vmatpush1.bf16.msra.mxu0 0
      %264 = vmatprep.subr.bf16.mxu0 0
      %265 = vmatpush1.bf16.msra.mxu0 0
      %266 = vmatprep.mubr.bf16.mxu0 0
      %267 = vmatmul.mubr.bf16.gmra.mrb[0].mxu0 %v232
      %v268 = vpop.f32.mrb[0].mxu0
      %v269 = vadd.f32 0.0, %v268
      %v270 = vpop.f32.mrb[0].mxu0
      %v271 = vpop.f32.mrb[0].mxu0
      %v272 = vpop.f32.mrb[0].mxu0
      %273 = vdwg.mxu0
      %v282 = vunpack.c.l.b16 %v178
      %v283 = vunpack.c.l.b16 %v179
      %v284 = vunpack.c.l.b16 %v180
      %v285 = vunpack.c.l.b16 %v181
      %v286 = vunpack.c.l.b16 %v182
      %v287 = vunpack.c.l.b16 %v183
      %v288 = vunpack.c.l.b16 %v184
      %v289 = vunpack.c.l.b16 %v185
      %v290 = vpack.c.b16 %v283, %v282
      %v291 = vpack.c.b16 %v285, %v284
      %v292 = vpack.c.b16 %v287, %v286
      %v293 = vpack.c.b16 %v289, %v288
      %v299 = vsel %vm230, %v177, 0
      %301 = vmatprep.subr.bf16.mxu0 0
      %302 = vmatpush1.bf16.msra.mxu0 %v290
      %303 = vmatprep.subr.bf16.mxu0 0
      %304 = vmatpush1.bf16.msra.mxu0 %v291
      %305 = vmatprep.subr.bf16.mxu0 0
      %306 = vmatpush1.bf16.msra.mxu0 %v292
      %307 = vmatprep.subr.bf16.mxu0 0
      %308 = vmatpush1.bf16.msra.mxu0 %v293
      %309 = vmatprep.subr.bf16.mxu0 0
      %310 = vmatpush1.bf16.msra.mxu0 0
      %311 = vmatprep.subr.bf16.mxu0 0
      %312 = vmatpush1.bf16.msra.mxu0 0
      %313 = vmatprep.subr.bf16.mxu0 0
      %314 = vmatpush1.bf16.msra.mxu0 0
      %315 = vmatprep.subr.bf16.mxu0 0
      %316 = vmatpush1.bf16.msra.mxu0 0
      %317 = vmatprep.subr.bf16.mxu0 0
      %318 = vmatpush1.bf16.msra.mxu0 0
      %319 = vmatprep.subr.bf16.mxu0 0
      %320 = vmatpush1.bf16.msra.mxu0 0
      %321 = vmatprep.subr.bf16.mxu0 0
      %322 = vmatpush1.bf16.msra.mxu0 0
      %323 = vmatprep.subr.bf16.mxu0 0
      %324 = vmatpush1.bf16.msra.mxu0 0
      %325 = vmatprep.subr.bf16.mxu0 0
      %326 = vmatpush1.bf16.msra.mxu0 0
      %327 = vmatprep.subr.bf16.mxu0 0
      %328 = vmatpush1.bf16.msra.mxu0 0
      %329 = vmatprep.subr.bf16.mxu0 0
      %330 = vmatpush1.bf16.msra.mxu0 0
      %331 = vmatprep.subr.bf16.mxu0 0
      %332 = vmatpush1.bf16.msra.mxu0 0
      %333 = vmatprep.mubr.bf16.mxu0 0
      %334 = vmatmul.mubr.bf16.gmra.mrb[0].mxu0 %v299
      %v335 = vpop.f32.mrb[0].mxu0
      %v336 = vadd.f32 %v269, %v335
      %v337 = vpop.f32.mrb[0].mxu0
      %v338 = vpop.f32.mrb[0].mxu0
      %v339 = vpop.f32.mrb[0].mxu0
      %340 = vdwg.mxu0
      %v341 = vmul.f32 %v336, 0.5
      %v342 = vmul.f32 %v336, 0.044715
      %v343 = vmul.f32 %v342, %v336
      %v344 = vmul.f32 %v343, %v336
      %v345 = vadd.f32 %v336, %v344
      %v346 = vmul.f32 %v345, 0.7978846
      %v347 = vtanh.pop %v346
      %v348 = vadd.f32 %v347, 1.0
      %v349 = vmul.f32 %v341, %v348
      %v350 = vpack.c.bf16 %v349, %v349
      %vm351 = vcmask 254976
      %352 = vst.msk [vmem:[%s175] sm:$0x3] %vm351, %v350
      %p353 = scmp.lt.s32.totalorder %s17, 1
      %s354 = scalar_select %p353, %s17, 1
      %p355 = scmp.lt.s32.totalorder %s18, 0
      %s356 = scalar_select %p355, %s18, 0
      %s357 = sadd.s32 %s356, %s354
      %s358 = smul.addr %s357, 2
      %s359 = scalar_lea.vmem %s2, %s358
      // Predicated region
      $region29: #{_lambda_.10} parent=27 // pred_check
        %p360 = pneg %p97
      $region30: #{_lambda_.10} parent=27 // pred_check_branch
        %362 = sbr.rel (%p360) target = $region32
      $region31: #{_lambda_.10} parent=27 // pred_region
        _
      $region32: #{_lambda_.10} parent=27 // pred_fallthru
        _
    $region28: #{_lambda_.10} parent=5 // pred_fallthru
      _
    %p363 = scmp.le.s32.totalorder 2, %s8
    // Predicated region
    $region33: #{_lambda_.10} parent=5 // pred_check
      %p364 = pneg %p363
    $region34: #{_lambda_.10} parent=5 // pred_check_branch
      %366 = sbr.rel (%p364) target = $region36
    $region35: #{_lambda_.10} parent=5 // pred_region
      %s367 = ssub.s32 %s8, 2
      // Predicated region
      $region37: #{_lambda_.10} parent=35 // pred_check
        %p368 = pneg %p103
      $region38: #{_lambda_.10} parent=35 // pred_check_branch
        %370 = sbr.rel (%p368) target = $region40
      $region39: #{_lambda_.10} parent=35 // pred_region
        %p371 = scmp.lt.s32.totalorder %s19, 1
        %s372 = scalar_select %p371, %s19, 1
        %p373 = scmp.lt.s32.totalorder %s20, 0
        %s374 = scalar_select %p373, %s20, 0
        %s375 = sadd.s32 %s374, %s372
        %s376 = smul.addr %s375, 2
        %s377 = scalar_lea.vmem %s2, %s376
      $region40: #{_lambda_.10} parent=35 // pred_fallthru
        _
    $region36: #{_lambda_.10} parent=5 // pred_fallthru
      _
  $region6: #{_lambda_.10} parent=0 // loop_footer
    %s12 = sadd.s32 1, %s8
  $region7: #{_lambda_.10} parent=0 // loop_footer_branch
    %7 = sbr.rel target = $region3
  $region8: #{_lambda_.10} parent=0 // loop_exit
    _

// kernel: _lambda_.11
$region0: #{_lambda_.11}
  #allocation0 [shape = 'u32[]', space=smem, size = 0x4, offset = 0x4, fixed_abs, tag = 'smem constant byte address 0x4 - core index']
  #allocation1 [shape = 'u32[144,128]{1,0:T(1,128)}', space=vmem, size = 0x12000, scoped, tag = 'internal scratch']
  %s0 = inlined_call_operand.vmem [shape: bf16[2,2,64], index: 0, kind: input, shape index: {}]
  %s1 = inlined_call_operand.vmem [shape: bf16[1,64,32], index: 1, kind: input, shape index: {}]
  %s2 = inlined_call_operand.hbm [shape: f32[2,2,32], index: 2, kind: output, shape index: {}]
  %s3 = sld [smem:[#allocation0]]
  $region41: #{_lambda_.11} parent=0
    _
  %s5 = ssub.s32 1, %s3
  %s6 = scalar_select 0, %s5, %s3
  $region1: #{_lambda_.11} parent=0
    #allocation2 [shape = 'u8[2048]{0}', space=vmem, size = 0x800, scoped, tag = 'output window, operand 0']
    #allocation3 [shape = 's32[2]{0}', space=sflag, size = 0x8, scoped, tag = 'scoped memory for _lambda_.11']
    %7 = vsyncpa [#allocation3], 0
    %s8 = scalar_lea.sflag [#allocation3], 1
    %9 = vsyncpa %s8, 0
    loop: start=0, step=1, limit=4
    $region2: #{_lambda_.11} parent=1 // loop_pre_header
      _
    $region3: #{_lambda_.11} parent=1 // loop_header
      %s11 = sphi 0, %s15
      %p12 = scmp.ge.s32.totalorder %s11, 4
      %s18 = sphi 0, %s30
      %s19 = sphi 0, %s26
      %s20 = sphi 0, %s18
      %s21 = sphi 0, %s19
      %s22 = sphi 0, %s20
      %s23 = sphi 0, %s21
      %s33 = sphi 0, %s35
      %s36 = sphi 0, %s33
      %s37 = sphi 0, %s36
      %s53 = sphi 0, %s37
      %s59 = sphi 0, %s61
      %s62 = sphi 0, %s59
      %s63 = sphi 0, %s62
      %s79 = sphi 0, %s63
      %s87 = sphi 0, %s89
      %s90 = sphi 0, %s87
      %s91 = sphi 0, %s90
      %s107 = sphi 0, %s91
    $region4: #{_lambda_.11} parent=1 // loop_header_branch
      %14 = sbr.rel (%p12) target = $region8
    $region5: #{_lambda_.11} parent=1 // loop_body
      %s16 = ssub.s32 %s11, 1
      %s17 = ssub.s32 %s11, 2
      %s24 = sadd.s32 1, %s19
      %p25 = scmp.ge.s32.totalorder %s24, 1
      %s26 = scalar_select %p25, 0, %s24
      %s27 = sadd.s32 1, %s18
      %s28 = scalar_select %p25, %s27, %s18
      %p29 = scmp.ge.s32.totalorder %s28, 2
      %s30 = scalar_select %p29, 0, %s28
      %s31 = ssub.s32 %s18, %s30
      %p32 = scmp.eq.s32.totalorder %s31, 0
      %s34 = sadd.s32 %s33, 1
      %s35 = scalar_select %p32, %s33, %s34
      %p38 = pneg %p32
      %p39 = scmp.eq.s32.totalorder %s11, 1
      %p40 = por %p38, %p39
      %p41 = scmp.ne.s32.totalorder %s33, %s36
      %p42 = scmp.eq.s32.totalorder %s11, 0
      %p43 = por %p41, %p42
      %p44 = scmp.ne.s32.totalorder %s33, %s36
      %p45 = scmp.eq.s32.totalorder %s16, 1
      %p46 = por %p44, %p45
      %p47 = scmp.ne.s32.totalorder %s36, %s37
      %p48 = scmp.eq.s32.totalorder %s16, 0
      %p49 = por %p47, %p48
      %p50 = scmp.ne.s32.totalorder %s36, %s37
      %p51 = scmp.eq.s32.totalorder %s17, 1
      %p52 = por %p50, %p51
      %p54 = scmp.ne.s32.totalorder %s37, %s53
      %p55 = scmp.eq.s32.totalorder %s17, 0
      %p56 = por %p54, %p55
      %s57 = ssub.s32 %s19, %s26
      %p58 = scmp.eq.s32.totalorder %s57, 0
      %s60 = sadd.s32 %s59, 1
      %s61 = scalar_select %p58, %s59, %s60
      %p64 = pneg %p58
      %p65 = scmp.eq.s32.totalorder %s11, 1
      %p66 = por %p64, %p65
      %p67 = scmp.ne.s32.totalorder %s59, %s62
      %p68 = scmp.eq.s32.totalorder %s11, 0
      %p69 = por %p67, %p68
      %p70 = scmp.ne.s32.totalorder %s59, %s62
      %p71 = scmp.eq.s32.totalorder %s16, 1
      %p72 = por %p70, %p71
      %p73 = scmp.ne.s32.totalorder %s62, %s63
      %p74 = scmp.eq.s32.totalorder %s16, 0
      %p75 = por %p73, %p74
      %p76 = scmp.ne.s32.totalorder %s62, %s63
      %p77 = scmp.eq.s32.totalorder %s17, 1
      %p78 = por %p76, %p77
      %p80 = scmp.ne.s32.totalorder %s63, %s79
      %p81 = scmp.eq.s32.totalorder %s17, 0
      %p82 = por %p80, %p81
      %s83 = ssub.s32 %s18, %s30
      %s84 = ssub.s32 %s19, %s26
      %s85 = sor.u32 %s83, %s84
      %p86 = scmp.eq.s32.totalorder %s85, 0
      %s88 = sadd.s32 %s87, 1
      %s89 = scalar_select %p86, %s87, %s88
      %p92 = pneg %p86
      %p93 = scmp.eq.s32.totalorder %s11, 1
      %p94 = por %p92, %p93
      %p95 = scmp.ne.s32.totalorder %s87, %s90
      %p96 = scmp.eq.s32.totalorder %s11, 0
      %p97 = por %p95, %p96
      %p98 = scmp.ne.s32.totalorder %s87, %s90
      %p99 = scmp.eq.s32.totalorder %s16, 1
      %p100 = por %p98, %p99
      %p101 = scmp.ne.s32.totalorder %s90, %s91
      %p102 = scmp.eq.s32.totalorder %s16, 0
      %p103 = por %p101, %p102
      %p104 = scmp.ne.s32.totalorder %s90, %s91
      %p105 = scmp.eq.s32.totalorder %s17, 1
      %p106 = por %p104, %p105
      %p108 = scmp.ne.s32.totalorder %s91, %s107
      %p109 = scmp.eq.s32.totalorder %s17, 0
      %p110 = por %p108, %p109
      %p111 = scmp.le.s32.totalorder 1, %s11
      %p112 = scmp.lt.s32.totalorder %s11, 3
      %p113 = pnand %p111, %p112
      %p114 = pneg %p113
      // Predicated region
      $region9: #{_lambda_.11} parent=5 // pred_check
        _
      $region10: #{_lambda_.11} parent=5 // pred_check_branch
        %116 = sbr.rel (%p113) target = $region12
      $region11: #{_lambda_.11} parent=5 // pred_region
        %s117 = ssub.s32 %s11, 1
        // Predicated region
        $region13: #{_lambda_.11} parent=11 // pred_check
          %p118 = pneg %p75
        $region14: #{_lambda_.11} parent=11 // pred_check_branch
          %120 = sbr.rel (%p118) target = $region16
        $region15: #{_lambda_.11} parent=11 // pred_region
          %p121 = scmp.lt.s32.totalorder %s21, 0
          %s122 = scalar_select %p121, %s21, 0
          %s123 = smul.addr %s122, 4
          %s124 = scalar_lea.vmem %s1, %s123
        $region16: #{_lambda_.11} parent=11 // pred_fallthru
          _
      $region12: #{_lambda_.11} parent=5 // pred_fallthru
        _
      %p125 = scmp.lt.s32.totalorder %s11, 2
      // Predicated region
      $region17: #{_lambda_.11} parent=5 // pred_check
        %p126 = pneg %p125
      $region18: #{_lambda_.11} parent=5 // pred_check_branch
        %128 = sbr.rel (%p126) target = $region20
      $region19: #{_lambda_.11} parent=5 // pred_region
        // Predicated region
        $region21: #{_lambda_.11} parent=19 // pred_check
          %p129 = pneg %p43
        $region22: #{_lambda_.11} parent=19 // pred_check_branch
          %131 = sbr.rel (%p129) target = $region24
        $region23: #{_lambda_.11} parent=19 // pred_region
          %p132 = scmp.lt.s32.totalorder %s18, 1
          %s133 = scalar_select %p132, %s18, 1
          %s134 = scalar_lea.vmem %s0, %s133
        $region24: #{_lambda_.11} parent=19 // pred_fallthru
          _
      $region20: #{_lambda_.11} parent=5 // pred_fallthru
        _
      %p135 = scmp.le.s32.totalorder 1, %s11
      %p136 = scmp.lt.s32.totalorder %s11, 3
      %p137 = pnand %p135, %p136
      %p138 = pneg %p137
      // Predicated region
      $region25: #{_lambda_.11} parent=5 // pred_check
        _
      $region26: #{_lambda_.11} parent=5 // pred_check_branch
        %140 = sbr.rel (%p137) target = $region28
      $region27: #{_lambda_.11} parent=5 // pred_region
        %s141 = ssub.s32 %s11, 1
        %p142 = scmp.lt.s32.totalorder %s20, 1
        %s143 = scalar_select %p142, %s20, 1
        %s144 = scalar_lea.vmem %s0, %s143
        %p145 = pneg %p49
        %p146 = pneg %p46
        %p147 = scmp.lt.s32.totalorder %s21, 0
        %s148 = scalar_select %p147, %s21, 0
        %s149 = smul.addr %s148, 4
        %s150 = scalar_lea.vmem %s1, %s149
        %p151 = pneg %p75
        %p152 = pneg %p72
        %p153 = pneg %p103
        %p154 = pneg %p100
        %s155 = sand.u32 %s90, 1
        %s156 = scalar_lea.sflag [#allocation3], %s155
        %s157 = sand.u32 %s90, 1
        %s158 = smul.addr %s157, 2
        %s159 = scalar_lea.vmem [#allocation2], %s158
        %p160 = scmp.lt.s32.totalorder %s20, 1
        %s161 = scalar_select %p160, %s20, 1
        %s162 = scalar_lea.vmem %s0, %s161
        %p163 = scmp.lt.s32.totalorder %s21, 0
        %s164 = scalar_select %p163, %s21, 0
        %s165 = smul.addr %s164, 4
        %s166 = scalar_lea.vmem %s1, %s165
        %v168 = vld [vmem:[%s162] sm:$0x1]
        %v169 = vld [vmem:[%s166] sm:$0xf]
        %v170 = vld [vmem:[%s166 + $0x4] sm:$0xf]
        %v171 = vld [vmem:[%s166 + $0x8] sm:$0xf]
        %v172 = vld [vmem:[%s166 + $0xc] sm:$0xf]
        %v173 = vld [vmem:[%s166 + $0x10] sm:$0xf]
        %v174 = vld [vmem:[%s166 + $0x14] sm:$0xf]
        %v175 = vld [vmem:[%s166 + $0x18] sm:$0xf]
        %v176 = vld [vmem:[%s166 + $0x1c] sm:$0xf]
        %v185 = vunpack.c.l.b16 %v169
        %v186 = vunpack.c.l.b16 %v170
        %v187 = vunpack.c.l.b16 %v171
        %v188 = vunpack.c.l.b16 %v172
        %v189 = vunpack.c.l.b16 %v173
        %v190 = vunpack.c.l.b16 %v174
        %v191 = vunpack.c.l.b16 %v175
        %v192 = vunpack.c.l.b16 %v176
        %v193 = vpack.c.b16 %v186, %v185
        %v194 = vpack.c.b16 %v188, %v187
        %v195 = vpack.c.b16 %v190, %v189
        %v196 = vpack.c.b16 %v192, %v191
        %vm201 = vcmask 523264
        %v203 = vsel %vm201, %v168, 0
        %205 = vmatprep.subr.bf16.mxu0 0
        %206 = vmatpush1.bf16.msra.mxu0 %v193
        %207 = vmatprep.subr.bf16.mxu0 0
        %208 = vmatpush1.bf16.msra.mxu0 %v194
        %209 = vmatprep.subr.bf16.mxu0 0
        %210 = vmatpush1.bf16.msra.mxu0 %v195
        %211 = vmatprep.subr.bf16.mxu0 0
        %212 = vmatpush1.bf16.msra.mxu0 %v196
        %213 = vmatprep.subr.bf16.mxu0 0
        %214 = vmatpush1.bf16.msra.mxu0 0
        %215 = vmatprep.subr.bf16.mxu0 0
        %216 = vmatpush1.bf16.msra.mxu0 0
        %217 = vmatprep.subr.bf16.mxu0 0
        %218 = vmatpush1.bf16.msra.mxu0 0
        %219 = vmatprep.subr.bf16.mxu0 0
        %220 = vmatpush1.bf16.msra.mxu0 0
        %221 = vmatprep.subr.bf16.mxu0 0
        %222 = vmatpush1.bf16.msra.mxu0 0
        %223 = vmatprep.subr.bf16.mxu0 0
        %224 = vmatpush1.bf16.msra.mxu0 0
        %225 = vmatprep.subr.bf16.mxu0 0
        %226 = vmatpush1.bf16.msra.mxu0 0
        %227 = vmatprep.subr.bf16.mxu0 0
        %228 = vmatpush1.bf16.msra.mxu0 0
        %229 = vmatprep.subr.bf16.mxu0 0
        %230 = vmatpush1.bf16.msra.mxu0 0
        %231 = vmatprep.subr.bf16.mxu0 0
        %232 = vmatpush1.bf16.msra.mxu0 0
        %233 = vmatprep.subr.bf16.mxu0 0
        %234 = vmatpush1.bf16.msra.mxu0 0
        %235 = vmatprep.subr.bf16.mxu0 0
        %236 = vmatpush1.bf16.msra.mxu0 0
        %237 = vmatprep.mubr.bf16.mxu0 0
        %238 = vmatmul.mubr.bf16.gmra.mrb[0].mxu0 %v203
        %v239 = vpop.f32.mrb[0].mxu0
        %v240 = vadd.f32 0.0, %v239
        %v241 = vpop.f32.mrb[0].mxu0
        %v242 = vpop.f32.mrb[0].mxu0
        %v243 = vpop.f32.mrb[0].mxu0
        %244 = vdwg.mxu0
        %v245 = vmul.f32 %v240, 0.5
        %v246 = vmul.f32 %v240, 0.044715
        %v247 = vmul.f32 %v246, %v240
        %v248 = vmul.f32 %v247, %v240
        %v249 = vadd.f32 %v240, %v248
        %v250 = vmul.f32 %v249, 0.7978846
        %v251 = vtanh.pop %v250
        %v252 = vadd.f32 %v251, 1.0
        %v253 = vmul.f32 %v245, %v252
        %vm254 = vcmask 254976
        %255 = vst.msk [vmem:[%s159] sm:$0x3] %vm254, %v253
        %s256 = sand.u32 %s90, 1
        %s257 = scalar_lea.sflag [#allocation3], %s256
        %s258 = sand.u32 %s90, 1
        %s259 = smul.addr %s258, 2
        %s260 = scalar_lea.vmem [#allocation2], %s259
        // Predicated region
        $region29: #{_lambda_.11} parent=27 // pred_check
          %p261 = pneg %p100
        $region30: #{_lambda_.11} parent=27 // pred_check_branch
          %263 = sbr.rel (%p261) target = $region32
        $region31: #{_lambda_.11} parent=27 // pred_region
          %s265 = ssub.s32 32, 32
          %266 = vsyncadd %s257, %s265
          %s267 = sadd.s32 %s21, %s20
          %s268 = smul.addr %s267, 32
          %s269 = scalar_lea.hbm %s2, %s268
          %s271 = sshll.u32 %s260, 4
          %s272 = int_to_ptr.vmem [resolvable:$true] %s271
          %274 = dma.vmem_to_hbm [thread:$0]  %s272, 32, %s269, %s257
        $region32: #{_lambda_.11} parent=27 // pred_fallthru
          _
      $region28: #{_lambda_.11} parent=5 // pred_fallthru
        _
      %p275 = scmp.le.s32.totalorder 2, %s11
      // Predicated region
      $region33: #{_lambda_.11} parent=5 // pred_check
        %p276 = pneg %p275
      $region34: #{_lambda_.11} parent=5 // pred_check_branch
        %278 = sbr.rel (%p276) target = $region36
      $region35: #{_lambda_.11} parent=5 // pred_region
        %s279 = ssub.s32 %s11, 2
        // Predicated region
        $region37: #{_lambda_.11} parent=35 // pred_check
          %p280 = pneg %p106
        $region38: #{_lambda_.11} parent=35 // pred_check_branch
          %282 = sbr.rel (%p280) target = $region40
        $region39: #{_lambda_.11} parent=35 // pred_region
          %s283 = sand.u32 %s91, 1
          %s284 = scalar_lea.sflag [#allocation3], %s283
          %s285 = sand.u32 %s91, 1
          %s286 = smul.addr %s285, 2
          %s287 = scalar_lea.vmem [#allocation2], %s286
          %288 = dma.done %s284, 32
        $region40: #{_lambda_.11} parent=35 // pred_fallthru
          _
      $region36: #{_lambda_.11} parent=5 // pred_fallthru
        _
    $region6: #{_lambda_.11} parent=1 // loop_footer
      %s15 = sadd.s32 1, %s11
    $region7: #{_lambda_.11} parent=1 // loop_footer_branch
      %10 = sbr.rel target = $region3
    $region8: #{_lambda_.11} parent=1 // loop_exit
      _
    %289 = vsyncpa [#allocation3], 1
    %s290 = scalar_lea.sflag [#allocation3], 1
    %291 = vsyncpa %s290, 1

</llo_original>
